<compile_context>
chip_gen: v7x
topology: tpu7x:2x2x1
jax: 0.10.0
libtpu: 0.0.40
codegen_flags: <defaults>
</compile_context>

<pallas_src>
import functools

import jax
import jax.numpy as jnp
from jax.experimental import pallas as pl
from jax.experimental.pallas import tpu as pltpu


def _round_up(v, m):
    return ((v + m - 1) // m) * m


# ----------------------------------------------------------------------------- kernel ----
def _car_kernel(x_ref, gamma_ref, beta_ref, wc_ref, bc_ref, wr_ref, br_ref, o_ref,
                *, precision):
    """Fused CAR forward on a (tm, D) tile of rows."""
    # --- LayerNorm (PyTorch semantics: biased variance, eps=1e-5, affine), f32 math ---
    x = x_ref[...].astype(jnp.float32)                      # short-lived: only for LN stats
    mean = jnp.mean(x, axis=-1, keepdims=True)
    xc = x - mean
    var = jnp.mean(xc * xc, axis=-1, keepdims=True)
    xn = xc * jax.lax.rsqrt(var + 1e-5) * gamma_ref[...] + beta_ref[...]

    # --- compress_proj: Linear(d_model -> d_compress); MXU accumulates in f32 ---
    wc = wc_ref[...]
    h = jnp.dot(xn.astype(wc.dtype), wc,
                preferred_element_type=jnp.float32, precision=precision) + bc_ref[...]

    # --- activation_fn = "relu" ---
    h = jnp.maximum(h, 0.0)

    # --- recover_proj: Linear(d_compress -> d_model) ---
    wr = wr_ref[...]
    y = jnp.dot(h.astype(wr.dtype), wr,
                preferred_element_type=jnp.float32, precision=precision) + br_ref[...]

    # --- dropout: identity in eval/inference; residual re-reads the input tile so the f32
    #     copy of x does not stay live across both matmuls ---
    # TODO(synk): nn.Dropout in *training* mode (random masking) is not implemented here.
    o_ref[...] = (y + x_ref[...].astype(jnp.float32)).astype(o_ref.dtype)


# ----------------------------------------------------------------- one-time capability ----
@functools.lru_cache(maxsize=1)
def _pipeline_mode_supported():
    """One-time probe: does this jax/Mosaic accept BlockSpec(pipeline_mode=pl.Buffered(k))?"""
    try:
        def _probe(a_ref, c_ref, o_ref):
            o_ref[...] = a_ref[...] + c_ref[...]

        f = pl.pallas_call(
            _probe,
            out_shape=jax.ShapeDtypeStruct((16, 128), jnp.float32),
            grid_spec=pltpu.PrefetchScalarGridSpec(
                num_scalar_prefetch=0,
                grid=(2,),
                in_specs=[
                    pl.BlockSpec((8, 128), lambda i: (i, 0), pipeline_mode=pl.Buffered(3)),
                    pl.BlockSpec((1, 128), lambda i: (0, 0), pipeline_mode=pl.Buffered(1)),
                ],
                out_specs=pl.BlockSpec((8, 128), lambda i: (i, 0)),
            ),
        )
        jax.block_until_ready(
            f(jnp.zeros((16, 128), jnp.float32), jnp.zeros((1, 128), jnp.float32)))
        return True
    except Exception:
        return False


@functools.lru_cache(maxsize=1)
def _vmem_capacity_bytes():
    """Physical VMEM per TensorCore (generation-aware); conservative 64 MiB fallback."""
    try:
        cap = int(pltpu.get_tpu_info().vmem_capacity_bytes)
        if cap > 0:
            return cap
    except Exception:
        pass
    return 64 * 1024 * 1024


# -------------------------------------------------------------------------- call build ----
def _build_car_call(tm, n_rows, D, Dc, out_dtype, use_pipeline_mode, precision,
                    vmem_limit_bytes, cost):
    def param_spec(shape):
        if use_pipeline_mode:
            return pl.BlockSpec(shape, lambda i: (0, 0), pipeline_mode=pl.Buffered(1))
        return pl.BlockSpec(shape, lambda i: (0, 0))

    if use_pipeline_mode:
        x_spec = pl.BlockSpec((tm, D), lambda i: (i, 0), pipeline_mode=pl.Buffered(3))
    else:
        x_spec = pl.BlockSpec((tm, D), lambda i: (i, 0))

    kernel = functools.partial(_car_kernel, precision=precision)

    return pl.pallas_call(
        kernel,
        out_shape=jax.ShapeDtypeStruct((n_rows, D), out_dtype),
        grid_spec=pltpu.PrefetchScalarGridSpec(
            num_scalar_prefetch=0,
            grid=(pl.cdiv(n_rows, tm),),
            in_specs=[
                x_spec,                 # x rows (pipelined, last tile may be partial)
                param_spec((1, D)),     # layernorm gamma
                param_spec((1, D)),     # layernorm beta
                param_spec((D, Dc)),    # compress weight (in, out)
                param_spec((1, Dc)),    # compress bias
                param_spec((Dc, D)),    # recover weight (in, out)
                param_spec((1, D)),     # recover bias
            ],
            out_specs=pl.BlockSpec((tm, D), lambda i: (i, 0)),
        ),
        compiler_params=pltpu.CompilerParams(
            dimension_semantics=("parallel",),
            vmem_limit_bytes=vmem_limit_bytes,
        ),
        cost_estimate=cost,
    )


# --------------------------------------------------------------------------- wrappers ----
def prepare_car_params(gamma, beta, wc, bc, wr, br, *, matmul_dtype=jnp.bfloat16):
    """One-time parameter preprocessing (hoisted out of the per-call path).

    Pads d_compress up to a multiple of 128 lanes (zero columns/rows/bias entries are an
    exact no-op through relu and the recover matmul), casts matmul operands to the MXU
    dtype, and reshapes 1-D params to (1, D)/(1, Dc) rows.
    """
    D, Dc = wc.shape
    Dc_pad = _round_up(max(Dc, 128), 128)
    if Dc_pad != Dc:
        wc = jnp.pad(wc, ((0, 0), (0, Dc_pad - Dc)))
        bc = jnp.pad(bc, ((0, Dc_pad - Dc),))
        wr = jnp.pad(wr, ((0, Dc_pad - Dc), (0, 0)))
    return (
        gamma.reshape(1, D).astype(jnp.float32),
        beta.reshape(1, D).astype(jnp.float32),
        wc.astype(matmul_dtype),
        bc.reshape(1, Dc_pad).astype(jnp.float32),
        wr.astype(matmul_dtype),
        br.reshape(1, D).astype(jnp.float32),
    )


def car_forward(x, params, *, tm=512):
    """x: (B, T, D) -> (B, T, D), params from prepare_car_params()."""
    gamma, beta, wc, bc, wr, br = params
    B, T, D = x.shape
    Dc = wc.shape[1]            # padded d_compress
    N = B * T

    x_bytes = jnp.dtype(x.dtype).itemsize
    w_bytes = jnp.dtype(wc.dtype).itemsize

    use_pm = _pipeline_mode_supported()
    in_bufs = 3 if use_pm else 2          # x tile buffering depth
    out_bufs = 2
    weight_bufs = 1 if use_pm else 2      # resident params single-buffered when possible

    def tile_vmem_bytes(tm_):
        io = (in_bufs + out_bufs) * tm_ * D * x_bytes
        # live intermediates: f32 x/xn/y (~3*D), bf16 xn copy, f32 h + bf16 h copy
        live = tm_ * (3 * D * 4 + D * w_bytes + Dc * (4 + w_bytes))
        weights = weight_bufs * (2 * D * Dc * w_bytes + (3 * D + Dc) * 4)
        return io + live + weights

    # Generation-aware VMEM budget (v7x: 64 MiB physical -> ~32 MiB; v5e/v6e: 128 -> ~80 MiB).
    cap = _vmem_capacity_bytes()
    if cap <= 64 * 1024 * 1024:
        budget = cap // 2
    else:
        budget = (cap * 5) // 8
    vmem_limit = int(min(cap - 16 * 1024 * 1024, budget + 32 * 1024 * 1024))

    # Row-tile selection: large tiles, multiple of 8, never larger than needed, >= 4 grid
    # steps when N allows (2 pipelined steps per TensorCore on v7x), fits the VMEM budget.
    tm = max(8, min(int(tm), max(8, (N // 8) * 8)))
    if N >= 32:
        tm = min(tm, _round_up(pl.cdiv(N, 4), 8))
    elif N >= 16:
        tm = min(tm, _round_up(pl.cdiv(N, 2), 8))
    while tm > 8 and tile_vmem_bytes(tm) > budget:
        tm = max(8, _round_up(tm // 2, 8))

    precision = jax.lax.Precision.HIGHEST if wc.dtype == jnp.float32 else None

    cost = pl.CostEstimate(
        flops=4 * N * D * Dc + 10 * N * D,          # two matmuls + LN / elementwise
        transcendentals=N,                          # one rsqrt per row
        bytes_accessed=2 * N * D * x_bytes + 2 * D * Dc * w_bytes + (3 * D + Dc) * 4,
    )

    # Contiguous leading-dim collapse / split: metadata-only, no padded copy of x and no
    # output slice — the (possibly partial) last tile is handled by Pallas OOB semantics.
    x2 = x.reshape(N, D)
    out = _build_car_call(tm, N, D, Dc, x.dtype, use_pm, precision, vmem_limit, cost)(
        x2, gamma, beta, wc, bc, wr, br)
    return out.reshape(B, T, D)


def reference_forward(x, gamma, beta, wc, bc, wr, br):
    """Pure-JAX reference matching PyTorch semantics (dropout in eval = identity)."""
    hp = jax.lax.Precision.HIGHEST
    xf = x.astype(jnp.float32)
    mean = jnp.mean(xf, axis=-1, keepdims=True)
    var = jnp.mean((xf - mean) ** 2, axis=-1, keepdims=True)
    xn = (xf - mean) / jnp.sqrt(var + 1e-5) * gamma + beta
    h = jnp.maximum(jnp.dot(xn, wc, precision=hp) + bc, 0.0)
    y = jnp.dot(h, wr, precision=hp) + br
    return (y + xf).astype(x.dtype)


if __name__ == "__main__":
    # Small shapes consistent with the module: batch=2, seq=8, d_model=32, d_compress=16.
    B, T, D, Dc = 2, 8, 32, 16
    key = jax.random.PRNGKey(0)
    k_x, k_g, k_b, k_wc, k_bc, k_wr, k_br = jax.random.split(key, 7)

    x = jax.random.normal(k_x, (B, T, D), dtype=jnp.float32)

    # Deterministic synthetic parameters (nn.Linear-like scale), no checkpoint loading.
    gamma = 1.0 + 0.1 * jax.random.normal(k_g, (D,), dtype=jnp.float32)
    beta = 0.1 * jax.random.normal(k_b, (D,), dtype=jnp.float32)
    wc = jax.random.uniform(k_wc, (D, Dc), minval=-1.0, maxval=1.0) / jnp.sqrt(D)
    bc = jax.random.uniform(k_bc, (Dc,), minval=-1.0, maxval=1.0) / jnp.sqrt(D)
    wr = jax.random.uniform(k_wr, (Dc, D), minval=-1.0, maxval=1.0) / jnp.sqrt(Dc)
    br = jax.random.uniform(k_br, (D,), minval=-1.0, maxval=1.0) / jnp.sqrt(Dc)

    ref = reference_forward(x, gamma, beta, wc, bc, wr, br)

    # Parameter preprocessing hoisted: done once, reused for every forward call.
    params_f32 = prepare_car_params(gamma, beta, wc, bc, wr, br, matmul_dtype=jnp.float32)
    params_bf16 = prepare_car_params(gamma, beta, wc, bc, wr, br, matmul_dtype=jnp.bfloat16)

    # 1) Exact-dtype path (f32 matmuls, precision=HIGHEST): matches reference tightly.
    out_f32 = jax.block_until_ready(car_forward(x, params_f32))
    assert out_f32.shape == (B, T, D)
    assert jnp.allclose(out_f32, ref, atol=1e-5, rtol=1e-5)

    # 2) Default perf path (bf16 matmul operands, f32 LN / accumulation / residual).
    out_bf16 = jax.block_until_ready(car_forward(x, params_bf16))
    assert out_bf16.shape == (B, T, D)
    assert jnp.allclose(out_bf16, ref, atol=5e-2, rtol=5e-2)

    # 3) Ragged row count (N not a multiple of the row tile): exercises the partial last
    #    tile path that replaced the wrapper-side pad/slice copies.
    xr = jax.random.normal(jax.random.PRNGKey(1), (2, 7, D), dtype=jnp.float32)
    ref_r = reference_forward(xr, gamma, beta, wc, bc, wr, br)
    out_r = jax.block_until_ready(car_forward(xr, params_bf16))
    assert out_r.shape == (2, 7, D)
    assert jnp.allclose(out_r, ref_r, atol=5e-2, rtol=5e-2)

    print("KERNEL_OK")
</pallas_src>

<mosaic_0001>
module attributes {stable_mosaic.version = 11 : i64} {
  func.func @_car_kernel(%arg0: i32, %arg1: memref<8x32xf32, #tpu.memory_space<vmem>>, %arg2: memref<1x32xf32, #tpu.memory_space<vmem>>, %arg3: memref<1x32xf32, #tpu.memory_space<vmem>>, %arg4: memref<32x128xf32, #tpu.memory_space<vmem>>, %arg5: memref<1x128xf32, #tpu.memory_space<vmem>>, %arg6: memref<128x32xf32, #tpu.memory_space<vmem>>, %arg7: memref<1x32xf32, #tpu.memory_space<vmem>>, %arg8: memref<8x32xf32, #tpu.memory_space<vmem>>) attributes {dimension_semantics = [#tpu.dimension_semantics<parallel>], iteration_bounds = array<i64: 2>, scalar_prefetch = 0 : i64, scratch_operands = 0 : i64, tpu.core_type = #tpu.core_type<tc>, window_params = [{transform_indices = @transform_0, window_bounds = array<i64: 8, 32>}, {pipeline_mode = #tpu.pipeline_mode<synchronous>, transform_indices = @transform_1, window_bounds = array<i64: 1, 32>}, {pipeline_mode = #tpu.pipeline_mode<synchronous>, transform_indices = @transform_2, window_bounds = array<i64: 1, 32>}, {pipeline_mode = #tpu.pipeline_mode<synchronous>, transform_indices = @transform_3, window_bounds = array<i64: 32, 128>}, {pipeline_mode = #tpu.pipeline_mode<synchronous>, transform_indices = @transform_4, window_bounds = array<i64: 1, 128>}, {pipeline_mode = #tpu.pipeline_mode<synchronous>, transform_indices = @transform_5, window_bounds = array<i64: 128, 32>}, {pipeline_mode = #tpu.pipeline_mode<synchronous>, transform_indices = @transform_6, window_bounds = array<i64: 1, 32>}, {transform_indices = @transform_7, window_bounds = array<i64: 8, 32>}]} {
    %c0 = arith.constant 0 : index
    %c0_0 = arith.constant 0 : index
    %0 = vector.load %arg1[%c0, %c0_0] : memref<8x32xf32, #tpu.memory_space<vmem>>, vector<8x32xf32>
    %cst = arith.constant dense<0.000000e+00> : vector<8xf32>
    %1 = vector.multi_reduction <add>, %0, %cst [1] : vector<8x32xf32> to vector<8xf32>
    %2 = vector.shape_cast %1 : vector<8xf32> to vector<8x1xf32>
    %cst_1 = arith.constant 3.200000e+01 : f32
    %3 = vector.broadcast %cst_1 : f32 to vector<8x1xf32>
    %4 = arith.divf %2, %3 : vector<8x1xf32>
    %5 = vector.broadcast %4 : vector<8x1xf32> to vector<8x32xf32>
    %6 = arith.subf %0, %5 : vector<8x32xf32>
    %7 = arith.mulf %6, %6 : vector<8x32xf32>
    %cst_2 = arith.constant dense<0.000000e+00> : vector<8xf32>
    %8 = vector.multi_reduction <add>, %7, %cst_2 [1] : vector<8x32xf32> to vector<8xf32>
    %9 = vector.shape_cast %8 : vector<8xf32> to vector<8x1xf32>
    %cst_3 = arith.constant 3.200000e+01 : f32
    %10 = vector.broadcast %cst_3 : f32 to vector<8x1xf32>
    %11 = arith.divf %9, %10 : vector<8x1xf32>
    %cst_4 = arith.constant 9.99999974E-6 : f32
    %12 = vector.broadcast %cst_4 : f32 to vector<8x1xf32>
    %13 = arith.addf %11, %12 : vector<8x1xf32>
    %14 = math.rsqrt %13 : vector<8x1xf32>
    %15 = vector.broadcast %14 : vector<8x1xf32> to vector<8x32xf32>
    %16 = arith.mulf %6, %15 : vector<8x32xf32>
    %c0_5 = arith.constant 0 : index
    %c0_6 = arith.constant 0 : index
    %17 = vector.load %arg2[%c0_5, %c0_6] : memref<1x32xf32, #tpu.memory_space<vmem>>, vector<1x32xf32>
    %18 = vector.broadcast %17 : vector<1x32xf32> to vector<8x32xf32>
    %19 = arith.mulf %16, %18 : vector<8x32xf32>
    %c0_7 = arith.constant 0 : index
    %c0_8 = arith.constant 0 : index
    %20 = vector.load %arg3[%c0_7, %c0_8] : memref<1x32xf32, #tpu.memory_space<vmem>>, vector<1x32xf32>
    %21 = vector.broadcast %20 : vector<1x32xf32> to vector<8x32xf32>
    %22 = arith.addf %19, %21 : vector<8x32xf32>
    %c0_9 = arith.constant 0 : index
    %c0_10 = arith.constant 0 : index
    %23 = vector.load %arg4[%c0_9, %c0_10] : memref<32x128xf32, #tpu.memory_space<vmem>>, vector<32x128xf32>
    %cst_11 = arith.constant dense<0.000000e+00> : vector<8x128xf32>
    %24 = tpu.matmul %22, %23, %cst_11 {dimension_numbers = #tpu.dot_dimension_numbers<[1], [0], [0], [1], [0, 0, 1, 1], [], []>, precision = #tpu.contract_precision<fp32>} : vector<8x32xf32>, vector<32x128xf32>, vector<8x128xf32> -> vector<8x128xf32>
    %c0_12 = arith.constant 0 : index
    %c0_13 = arith.constant 0 : index
    %25 = vector.load %arg5[%c0_12, %c0_13] : memref<1x128xf32, #tpu.memory_space<vmem>>, vector<1x128xf32>
    %26 = vector.broadcast %25 : vector<1x128xf32> to vector<8x128xf32>
    %27 = arith.addf %24, %26 : vector<8x128xf32>
    %cst_14 = arith.constant 0.000000e+00 : f32
    %28 = vector.broadcast %cst_14 : f32 to vector<8x128xf32>
    %29 = arith.maximumf %27, %28 : vector<8x128xf32>
    %c0_15 = arith.constant 0 : index
    %c0_16 = arith.constant 0 : index
    %30 = vector.load %arg6[%c0_15, %c0_16] : memref<128x32xf32, #tpu.memory_space<vmem>>, vector<128x32xf32>
    %cst_17 = arith.constant dense<0.000000e+00> : vector<8x32xf32>
    %31 = tpu.matmul %29, %30, %cst_17 {dimension_numbers = #tpu.dot_dimension_numbers<[1], [0], [0], [1], [0, 0, 1, 1], [], []>, precision = #tpu.contract_precision<fp32>} : vector<8x128xf32>, vector<128x32xf32>, vector<8x32xf32> -> vector<8x32xf32>
    %c0_18 = arith.constant 0 : index
    %c0_19 = arith.constant 0 : index
    %32 = vector.load %arg7[%c0_18, %c0_19] : memref<1x32xf32, #tpu.memory_space<vmem>>, vector<1x32xf32>
    %33 = vector.broadcast %32 : vector<1x32xf32> to vector<8x32xf32>
    %34 = arith.addf %31, %33 : vector<8x32xf32>
    %c0_20 = arith.constant 0 : index
    %c0_21 = arith.constant 0 : index
    %35 = vector.load %arg1[%c0_20, %c0_21] : memref<8x32xf32, #tpu.memory_space<vmem>>, vector<8x32xf32>
    %36 = arith.addf %34, %35 : vector<8x32xf32>
    %c0_22 = arith.constant 0 : index
    %c0_23 = arith.constant 0 : index
    %37 = vector.load %arg8[%c0_22, %c0_23] : memref<8x32xf32, #tpu.memory_space<vmem>>, vector<8x32xf32>
    tpu.vector_store %arg8[%c0_22, %c0_23], %36 {strides = array<i32>} : memref<8x32xf32, #tpu.memory_space<vmem>>, vector<8x32xf32>,
    return
  }
  func.func @transform_0(%arg0: i32) -> (i32, i32) {
    %c0_i32 = arith.constant 0 : i32
    %c0_i32_0 = arith.constant 0 : i32
    return %arg0, %c0_i32 : i32, i32
  }
  func.func @transform_1(%arg0: i32) -> (i32, i32) {
    %c0_i32 = arith.constant 0 : i32
    %c0_i32_0 = arith.constant 0 : i32
    %c0_i32_1 = arith.constant 0 : i32
    return %c0_i32, %c0_i32_0 : i32, i32
  }
  func.func @transform_2(%arg0: i32) -> (i32, i32) {
    %c0_i32 = arith.constant 0 : i32
    %c0_i32_0 = arith.constant 0 : i32
    %c0_i32_1 = arith.constant 0 : i32
    return %c0_i32, %c0_i32_0 : i32, i32
  }
  func.func @transform_3(%arg0: i32) -> (i32, i32) {
    %c0_i32 = arith.constant 0 : i32
    %c0_i32_0 = arith.constant 0 : i32
    %c0_i32_1 = arith.constant 0 : i32
    return %c0_i32, %c0_i32_0 : i32, i32
  }
  func.func @transform_4(%arg0: i32) -> (i32, i32) {
    %c0_i32 = arith.constant 0 : i32
    %c0_i32_0 = arith.constant 0 : i32
    %c0_i32_1 = arith.constant 0 : i32
    return %c0_i32, %c0_i32_0 : i32, i32
  }
  func.func @transform_5(%arg0: i32) -> (i32, i32) {
    %c0_i32 = arith.constant 0 : i32
    %c0_i32_0 = arith.constant 0 : i32
    %c0_i32_1 = arith.constant 0 : i32
    return %c0_i32, %c0_i32_0 : i32, i32
  }
  func.func @transform_6(%arg0: i32) -> (i32, i32) {
    %c0_i32 = arith.constant 0 : i32
    %c0_i32_0 = arith.constant 0 : i32
    %c0_i32_1 = arith.constant 0 : i32
    return %c0_i32, %c0_i32_0 : i32, i32
  }
  func.func @transform_7(%arg0: i32) -> (i32, i32) {
    %c0_i32 = arith.constant 0 : i32
    %c0_i32_0 = arith.constant 0 : i32
    return %arg0, %c0_i32 : i32, i32
  }
}

</mosaic_0001>

<llo_original>
// kernel: tpu_custom_call.1
$region0: #{tpu_custom_call.1}
  #allocation0 [shape = 'u32[]', space=smem, size = 0x4, offset = 0x4, fixed_abs, tag = 'smem constant byte address 0x4 - core index']
  #allocation1 [shape = 'u32[144,128]{1,0:T(1,128)}', space=vmem, size = 0x12000, scoped, tag = 'internal scratch']
  %s0 = inlined_call_operand.vmem [shape: f32[16,32], index: 0, kind: input, shape index: {}]
  %s1 = inlined_call_operand.vmem [shape: f32[1,32], index: 1, kind: input, shape index: {}]
  %s2 = inlined_call_operand.vmem [shape: f32[1,32], index: 2, kind: input, shape index: {}]
  %s3 = inlined_call_operand.vmem [shape: f32[32,128], index: 3, kind: input, shape index: {}]
  %s4 = inlined_call_operand.vmem [shape: f32[1,128], index: 4, kind: input, shape index: {}]
  %s5 = inlined_call_operand.vmem [shape: f32[128,32], index: 5, kind: input, shape index: {}]
  %s6 = inlined_call_operand.vmem [shape: f32[1,32], index: 6, kind: input, shape index: {}]
  %s7 = inlined_call_operand.hbm [shape: f32[16,32], index: 7, kind: output, shape index: {}]
  %s8 = sld [smem:[#allocation0]]
  $region61: #{tpu_custom_call.1} parent=0
    _
  %s10 = ssub.s32 1, %s8
  %s11 = scalar_select 0, %s10, %s8
  $region1: #{tpu_custom_call.1} parent=0
    #allocation2 [shape = 'u8[8192]{0}', space=vmem, size = 0x2000, scoped, tag = 'output window, operand 0']
    #allocation3 [shape = 's32[2]{0}', space=sflag, size = 0x8, scoped, tag = 'scoped memory for tpu_custom_call.1']
    %12 = vsyncpa [#allocation3], 0
    %s13 = scalar_lea.sflag [#allocation3], 1
    %14 = vsyncpa %s13, 0
    loop: start=0, step=1, limit=4
    $region2: #{tpu_custom_call.1} parent=1 // loop_pre_header
      _
    $region3: #{tpu_custom_call.1} parent=1 // loop_header
      %s16 = sphi 0, %s20
      %p17 = scmp.ge.s32.totalorder %s16, 4
      %s26 = sphi 0, %s28
      %s29 = sphi 0, %s26
      %s30 = sphi 0, %s29
      %s46 = sphi 0, %s30
      %s50 = sphi 0, %s50
      %s52 = sphi 0, %s50
      %s53 = sphi 0, %s52
      %s67 = sphi 0, %s53
      %s71 = sphi 0, %s71
      %s73 = sphi 0, %s71
      %s74 = sphi 0, %s73
      %s88 = sphi 0, %s74
      %s92 = sphi 0, %s92
      %s94 = sphi 0, %s92
      %s95 = sphi 0, %s94
      %s109 = sphi 0, %s95
      %s113 = sphi 0, %s113
      %s115 = sphi 0, %s113
      %s116 = sphi 0, %s115
      %s130 = sphi 0, %s116
      %s134 = sphi 0, %s134
      %s136 = sphi 0, %s134
      %s137 = sphi 0, %s136
      %s151 = sphi 0, %s137
      %s155 = sphi 0, %s155
      %s157 = sphi 0, %s155
      %s158 = sphi 0, %s157
      %s172 = sphi 0, %s158
      %s178 = sphi 0, %s180
      %s181 = sphi 0, %s178
      %s182 = sphi 0, %s181
      %s198 = sphi 0, %s182
    $region4: #{tpu_custom_call.1} parent=1 // loop_header_branch
      %19 = sbr.rel (%p17) target = $region8
    $region5: #{tpu_custom_call.1} parent=1 // loop_body
      %s21 = ssub.s32 %s16, 1
      %s22 = ssub.s32 %s16, 2
      %s23 = sadd.s32 %s16, 1
      %s24 = ssub.s32 %s16, %s23
      %p25 = scmp.eq.s32.totalorder %s24, 0
      %s27 = sadd.s32 %s26, 1
      %s28 = scalar_select %p25, %s26, %s27
      %p31 = pneg %p25
      %p32 = scmp.eq.s32.totalorder %s16, 1
      %p33 = por %p31, %p32
      %p34 = scmp.ne.s32.totalorder %s26, %s29
      %p35 = scmp.eq.s32.totalorder %s16, 0
      %p36 = por %p34, %p35
      %p37 = scmp.ne.s32.totalorder %s26, %s29
      %p38 = scmp.eq.s32.totalorder %s21, 1
      %p39 = por %p37, %p38
      %p40 = scmp.ne.s32.totalorder %s29, %s30
      %p41 = scmp.eq.s32.totalorder %s21, 0
      %p42 = por %p40, %p41
      %p43 = scmp.ne.s32.totalorder %s29, %s30
      %p44 = scmp.eq.s32.totalorder %s22, 1
      %p45 = por %p43, %p44
      %p47 = scmp.ne.s32.totalorder %s30, %s46
      %p48 = scmp.eq.s32.totalorder %s22, 0
      %p49 = por %p47, %p48
      %s51 = sadd.s32 %s50, 1
      %p54 = scmp.eq.s32.totalorder %s16, 1
      %p55 = scmp.ne.s32.totalorder %s50, %s52
      %p56 = scmp.eq.s32.totalorder %s16, 0
      %p57 = por %p55, %p56
      %p58 = scmp.ne.s32.totalorder %s50, %s52
      %p59 = scmp.eq.s32.totalorder %s21, 1
      %p60 = por %p58, %p59
      %p61 = scmp.ne.s32.totalorder %s52, %s53
      %p62 = scmp.eq.s32.totalorder %s21, 0
      %p63 = por %p61, %p62
      %p64 = scmp.ne.s32.totalorder %s52, %s53
      %p65 = scmp.eq.s32.totalorder %s22, 1
      %p66 = por %p64, %p65
      %p68 = scmp.ne.s32.totalorder %s53, %s67
      %p69 = scmp.eq.s32.totalorder %s22, 0
      %p70 = por %p68, %p69
      %s72 = sadd.s32 %s71, 1
      %p75 = scmp.eq.s32.totalorder %s16, 1
      %p76 = scmp.ne.s32.totalorder %s71, %s73
      %p77 = scmp.eq.s32.totalorder %s16, 0
      %p78 = por %p76, %p77
      %p79 = scmp.ne.s32.totalorder %s71, %s73
      %p80 = scmp.eq.s32.totalorder %s21, 1
      %p81 = por %p79, %p80
      %p82 = scmp.ne.s32.totalorder %s73, %s74
      %p83 = scmp.eq.s32.totalorder %s21, 0
      %p84 = por %p82, %p83
      %p85 = scmp.ne.s32.totalorder %s73, %s74
      %p86 = scmp.eq.s32.totalorder %s22, 1
      %p87 = por %p85, %p86
      %p89 = scmp.ne.s32.totalorder %s74, %s88
      %p90 = scmp.eq.s32.totalorder %s22, 0
      %p91 = por %p89, %p90
      %s93 = sadd.s32 %s92, 1
      %p96 = scmp.eq.s32.totalorder %s16, 1
      %p97 = scmp.ne.s32.totalorder %s92, %s94
      %p98 = scmp.eq.s32.totalorder %s16, 0
      %p99 = por %p97, %p98
      %p100 = scmp.ne.s32.totalorder %s92, %s94
      %p101 = scmp.eq.s32.totalorder %s21, 1
      %p102 = por %p100, %p101
      %p103 = scmp.ne.s32.totalorder %s94, %s95
      %p104 = scmp.eq.s32.totalorder %s21, 0
      %p105 = por %p103, %p104
      %p106 = scmp.ne.s32.totalorder %s94, %s95
      %p107 = scmp.eq.s32.totalorder %s22, 1
      %p108 = por %p106, %p107
      %p110 = scmp.ne.s32.totalorder %s95, %s109
      %p111 = scmp.eq.s32.totalorder %s22, 0
      %p112 = por %p110, %p111
      %s114 = sadd.s32 %s113, 1
      %p117 = scmp.eq.s32.totalorder %s16, 1
      %p118 = scmp.ne.s32.totalorder %s113, %s115
      %p119 = scmp.eq.s32.totalorder %s16, 0
      %p120 = por %p118, %p119
      %p121 = scmp.ne.s32.totalorder %s113, %s115
      %p122 = scmp.eq.s32.totalorder %s21, 1
      %p123 = por %p121, %p122
      %p124 = scmp.ne.s32.totalorder %s115, %s116
      %p125 = scmp.eq.s32.totalorder %s21, 0
      %p126 = por %p124, %p125
      %p127 = scmp.ne.s32.totalorder %s115, %s116
      %p128 = scmp.eq.s32.totalorder %s22, 1
      %p129 = por %p127, %p128
      %p131 = scmp.ne.s32.totalorder %s116, %s130
      %p132 = scmp.eq.s32.totalorder %s22, 0
      %p133 = por %p131, %p132
      %s135 = sadd.s32 %s134, 1
      %p138 = scmp.eq.s32.totalorder %s16, 1
      %p139 = scmp.ne.s32.totalorder %s134, %s136
      %p140 = scmp.eq.s32.totalorder %s16, 0
      %p141 = por %p139, %p140
      %p142 = scmp.ne.s32.totalorder %s134, %s136
      %p143 = scmp.eq.s32.totalorder %s21, 1
      %p144 = por %p142, %p143
      %p145 = scmp.ne.s32.totalorder %s136, %s137
      %p146 = scmp.eq.s32.totalorder %s21, 0
      %p147 = por %p145, %p146
      %p148 = scmp.ne.s32.totalorder %s136, %s137
      %p149 = scmp.eq.s32.totalorder %s22, 1
      %p150 = por %p148, %p149
      %p152 = scmp.ne.s32.totalorder %s137, %s151
      %p153 = scmp.eq.s32.totalorder %s22, 0
      %p154 = por %p152, %p153
      %s156 = sadd.s32 %s155, 1
      %p159 = scmp.eq.s32.totalorder %s16, 1
      %p160 = scmp.ne.s32.totalorder %s155, %s157
      %p161 = scmp.eq.s32.totalorder %s16, 0
      %p162 = por %p160, %p161
      %p163 = scmp.ne.s32.totalorder %s155, %s157
      %p164 = scmp.eq.s32.totalorder %s21, 1
      %p165 = por %p163, %p164
      %p166 = scmp.ne.s32.totalorder %s157, %s158
      %p167 = scmp.eq.s32.totalorder %s21, 0
      %p168 = por %p166, %p167
      %p169 = scmp.ne.s32.totalorder %s157, %s158
      %p170 = scmp.eq.s32.totalorder %s22, 1
      %p171 = por %p169, %p170
      %p173 = scmp.ne.s32.totalorder %s158, %s172
      %p174 = scmp.eq.s32.totalorder %s22, 0
      %p175 = por %p173, %p174
      %s176 = ssub.s32 %s16, %s23
      %p177 = scmp.eq.s32.totalorder %s176, 0
      %s179 = sadd.s32 %s178, 1
      %s180 = scalar_select %p177, %s178, %s179
      %p183 = pneg %p177
      %p184 = scmp.eq.s32.totalorder %s16, 1
      %p185 = por %p183, %p184
      %p186 = scmp.ne.s32.totalorder %s178, %s181
      %p187 = scmp.eq.s32.totalorder %s16, 0
      %p188 = por %p186, %p187
      %p189 = scmp.ne.s32.totalorder %s178, %s181
      %p190 = scmp.eq.s32.totalorder %s21, 1
      %p191 = por %p189, %p190
      %p192 = scmp.ne.s32.totalorder %s181, %s182
      %p193 = scmp.eq.s32.totalorder %s21, 0
      %p194 = por %p192, %p193
      %p195 = scmp.ne.s32.totalorder %s181, %s182
      %p196 = scmp.eq.s32.totalorder %s22, 1
      %p197 = por %p195, %p196
      %p199 = scmp.ne.s32.totalorder %s182, %s198
      %p200 = scmp.eq.s32.totalorder %s22, 0
      %p201 = por %p199, %p200
      %p202 = scmp.le.s32.totalorder 1, %s16
      %p203 = scmp.lt.s32.totalorder %s16, 3
      %p204 = pnand %p202, %p203
      %p205 = pneg %p204
      // Predicated region
      $region9: #{tpu_custom_call.1} parent=5 // pred_check
        _
      $region10: #{tpu_custom_call.1} parent=5 // pred_check_branch
        %207 = sbr.rel (%p204) target = $region12
      $region11: #{tpu_custom_call.1} parent=5 // pred_region
        %s208 = ssub.s32 %s16, 1
        // Predicated region
        $region13: #{tpu_custom_call.1} parent=11 // pred_check
          %p209 = pneg %p63
        $region14: #{tpu_custom_call.1} parent=11 // pred_check_branch
          %211 = sbr.rel (%p209) target = $region16
        $region15: #{tpu_custom_call.1} parent=11 // pred_region
          _
        $region16: #{tpu_custom_call.1} parent=11 // pred_fallthru
          _
        // Predicated region
        $region17: #{tpu_custom_call.1} parent=11 // pred_check
          %p212 = pneg %p84
        $region18: #{tpu_custom_call.1} parent=11 // pred_check_branch
          %214 = sbr.rel (%p212) target = $region20
        $region19: #{tpu_custom_call.1} parent=11 // pred_region
          _
        $region20: #{tpu_custom_call.1} parent=11 // pred_fallthru
          _
        // Predicated region
        $region21: #{tpu_custom_call.1} parent=11 // pred_check
          %p215 = pneg %p105
        $region22: #{tpu_custom_call.1} parent=11 // pred_check_branch
          %217 = sbr.rel (%p215) target = $region24
        $region23: #{tpu_custom_call.1} parent=11 // pred_region
          _
        $region24: #{tpu_custom_call.1} parent=11 // pred_fallthru
          _
        // Predicated region
        $region25: #{tpu_custom_call.1} parent=11 // pred_check
          %p218 = pneg %p126
        $region26: #{tpu_custom_call.1} parent=11 // pred_check_branch
          %220 = sbr.rel (%p218) target = $region28
        $region27: #{tpu_custom_call.1} parent=11 // pred_region
          _
        $region28: #{tpu_custom_call.1} parent=11 // pred_fallthru
          _
        // Predicated region
        $region29: #{tpu_custom_call.1} parent=11 // pred_check
          %p221 = pneg %p147
        $region30: #{tpu_custom_call.1} parent=11 // pred_check_branch
          %223 = sbr.rel (%p221) target = $region32
        $region31: #{tpu_custom_call.1} parent=11 // pred_region
          _
        $region32: #{tpu_custom_call.1} parent=11 // pred_fallthru
          _
        // Predicated region
        $region33: #{tpu_custom_call.1} parent=11 // pred_check
          %p224 = pneg %p168
        $region34: #{tpu_custom_call.1} parent=11 // pred_check_branch
          %226 = sbr.rel (%p224) target = $region36
        $region35: #{tpu_custom_call.1} parent=11 // pred_region
          _
        $region36: #{tpu_custom_call.1} parent=11 // pred_fallthru
          _
      $region12: #{tpu_custom_call.1} parent=5 // pred_fallthru
        _
      %p227 = scmp.lt.s32.totalorder %s16, 2
      // Predicated region
      $region37: #{tpu_custom_call.1} parent=5 // pred_check
        %p228 = pneg %p227
      $region38: #{tpu_custom_call.1} parent=5 // pred_check_branch
        %230 = sbr.rel (%p228) target = $region40
      $region39: #{tpu_custom_call.1} parent=5 // pred_region
        // Predicated region
        $region41: #{tpu_custom_call.1} parent=39 // pred_check
          %p231 = pneg %p36
        $region42: #{tpu_custom_call.1} parent=39 // pred_check_branch
          %233 = sbr.rel (%p231) target = $region44
        $region43: #{tpu_custom_call.1} parent=39 // pred_region
          %p234 = scmp.lt.s32.totalorder %s16, 1
          %s235 = scalar_select %p234, %s16, 1
          %s236 = smul.addr %s235, 8
          %s237 = scalar_lea.vmem %s0, %s236
        $region44: #{tpu_custom_call.1} parent=39 // pred_fallthru
          _
      $region40: #{tpu_custom_call.1} parent=5 // pred_fallthru
        _
      %p238 = scmp.le.s32.totalorder 1, %s16
      %p239 = scmp.lt.s32.totalorder %s16, 3
      %p240 = pnand %p238, %p239
      %p241 = pneg %p240
      // Predicated region
      $region45: #{tpu_custom_call.1} parent=5 // pred_check
        _
      $region46: #{tpu_custom_call.1} parent=5 // pred_check_branch
        %243 = sbr.rel (%p240) target = $region48
      $region47: #{tpu_custom_call.1} parent=5 // pred_region
        %s244 = ssub.s32 %s16, 1
        %p245 = scmp.lt.s32.totalorder %s21, 1
        %s246 = scalar_select %p245, %s21, 1
        %s247 = smul.addr %s246, 8
        %s248 = scalar_lea.vmem %s0, %s247
        %p249 = pneg %p42
        %p250 = pneg %p39
        %p251 = pneg %p63
        %p252 = pneg %p60
        %p253 = pneg %p84
        %p254 = pneg %p81
        %p255 = pneg %p105
        %p256 = pneg %p102
        %p257 = pneg %p126
        %p258 = pneg %p123
        %p259 = pneg %p147
        %p260 = pneg %p144
        %p261 = pneg %p168
        %p262 = pneg %p165
        %p263 = pneg %p194
        %p264 = pneg %p191
        %s265 = sand.u32 %s181, 1
        %s266 = scalar_lea.sflag [#allocation3], %s265
        %s267 = sand.u32 %s181, 1
        %s268 = smul.addr %s267, 8
        %s269 = scalar_lea.vmem [#allocation2], %s268
        %p270 = scmp.lt.s32.totalorder %s21, 1
        %s271 = scalar_select %p270, %s21, 1
        %s272 = smul.addr %s271, 8
        %s273 = scalar_lea.vmem %s0, %s272
        %v274 = vld [vmem:[%s273] sm:$0xff]
        %vm275 = vcmask 261120
        %v276 = vsel %vm275, %v274, 0.0
        %277 = vadd.xlane.f32.xlu0 %v276
        %v278 = vpop.xlane.xlu0 %277
        %v279 = vrcp.pop 32.0
        %v280 = vmul.f32 %v278, %v279
        %v281 = vsub.f32 %v274, %v280
        %v282 = vmul.f32 %v281, %v281
        %v283 = vsel %vm275, %v282, 0.0
        %284 = vadd.xlane.f32.xlu0 %v283
        %v285 = vpop.xlane.xlu0 %284
        %v286 = vmul.f32 %v285, %v279
        %v287 = vadd.f32 %v286, 1e-05
        %v288 = vrsqrt.pop %v287
        %v289 = vmul.f32 %v281, %v288
        %v290 = vld [vmem:[%s1] sm:$0x1]
        %v292 = vlaneseq
        %v293 = vshrl.u32 %v292, 7
        %v294 = vsub.s32 0, %v293
        %v295 = vrot.slane %v290, %v294
        %v297 = vmul.f32 %v289, %v295
        %v298 = vld [vmem:[%s2] sm:$0x1]
        %v300 = vlaneseq
        %v301 = vshrl.u32 %v300, 7
        %v302 = vsub.s32 0, %v301
        %v303 = vrot.slane %v298, %v302
        %v305 = vadd.f32 %v297, %v303
        %v306 = vld [vmem:[%s3] sm:$0xff]
        %v307 = vld [vmem:[%s3 + $0x8] sm:$0xff]
        %v308 = vld [vmem:[%s3 + $0x10] sm:$0xff]
        %v309 = vld [vmem:[%s3 + $0x18] sm:$0xff]
        %v310 = vld [vmem:[%s4] sm:$0x1]
        %v312 = vlaneseq
        %v313 = vshrl.u32 %v312, 7
        %v314 = vsub.s32 0, %v313
        %v315 = vrot.slane %v310, %v314
        %v318 = vsel %vm275, %v305, 0
        %320 = vmatprep.subr.mxu0 0.0
        %v321 = vand.u32 %v306, 4294901760
        %322 = vmatpush1.msra.mxu0 %v321
        %323 = vmatprep.subr.mxu0 0.0
        %v324 = vand.u32 %v307, 4294901760
        %325 = vmatpush1.msra.mxu0 %v324
        %326 = vmatprep.subr.mxu0 0.0
        %v327 = vand.u32 %v308, 4294901760
        %328 = vmatpush1.msra.mxu0 %v327
        %329 = vmatprep.subr.mxu0 0.0
        %v330 = vand.u32 %v309, 4294901760
        %331 = vmatpush1.msra.mxu0 %v330
        %332 = vmatprep.subr.mxu0 0.0
        %333 = vmatpush1.msra.mxu0 0.0
        %334 = vmatprep.subr.mxu0 0.0
        %335 = vmatpush1.msra.mxu0 0.0
        %336 = vmatprep.subr.mxu0 0.0
        %337 = vmatpush1.msra.mxu0 0.0
        %338 = vmatprep.subr.mxu0 0.0
        %339 = vmatpush1.msra.mxu0 0.0
        %340 = vmatprep.subr.mxu0 0.0
        %341 = vmatpush1.msra.mxu0 0.0
        %342 = vmatprep.subr.mxu0 0.0
        %343 = vmatpush1.msra.mxu0 0.0
        %344 = vmatprep.subr.mxu0 0.0
        %345 = vmatpush1.msra.mxu0 0.0
        %346 = vmatprep.subr.mxu0 0.0
        %347 = vmatpush1.msra.mxu0 0.0
        %348 = vmatprep.subr.mxu0 0.0
        %349 = vmatpush1.msra.mxu0 0.0
        %350 = vmatprep.subr.mxu0 0.0
        %351 = vmatpush1.msra.mxu0 0.0
        %352 = vmatprep.subr.mxu0 0.0
        %353 = vmatpush1.msra.mxu0 0.0
        %354 = vmatprep.subr.mxu0 0.0
        %355 = vmatpush1.msra.mxu0 0.0
        %356 = vmatprep.subr.mxu0 0.0
        %357 = vmatpush1.msra.mxu0 0.0
        %358 = vmatprep.subr.mxu0 0.0
        %359 = vmatpush1.msra.mxu0 0.0
        %360 = vmatprep.subr.mxu0 0.0
        %361 = vmatpush1.msra.mxu0 0.0
        %362 = vmatprep.subr.mxu0 0.0
        %363 = vmatpush1.msra.mxu0 0.0
        %364 = vmatprep.subr.mxu0 0.0
        %365 = vmatpush1.msra.mxu0 0.0
        %366 = vmatprep.subr.mxu0 0.0
        %367 = vmatpush1.msra.mxu0 0.0
        %368 = vmatprep.subr.mxu0 0.0
        %369 = vmatpush1.msra.mxu0 0.0
        %370 = vmatprep.subr.mxu0 0.0
        %371 = vmatpush1.msra.mxu0 0.0
        %372 = vmatprep.subr.mxu0 0.0
        %373 = vmatpush1.msra.mxu0 0.0
        %374 = vmatprep.subr.mxu0 0.0
        %375 = vmatpush1.msra.mxu0 0.0
        %376 = vmatprep.subr.mxu0 0.0
        %377 = vmatpush1.msra.mxu0 0.0
        %378 = vmatprep.subr.mxu0 0.0
        %379 = vmatpush1.msra.mxu0 0.0
        %380 = vmatprep.subr.mxu0 0.0
        %381 = vmatpush1.msra.mxu0 0.0
        %382 = vmatprep.subr.mxu0 0.0
        %383 = vmatpush1.msra.mxu0 0.0
        %384 = vmatprep.subr.mxu0 0.0
        %385 = vmatpush1.msra.mxu0 0.0
        %386 = vmatprep.subr.mxu0 0.0
        %387 = vmatpush1.msra.mxu0 0.0
        %388 = vmatprep.mubr.f32.mxu0 0.0
        %v389 = vand.u32 %v318, 4294901760
        %v390 = vsub.f32 %v318, %v389
        %v391 = vand.u32 %v390, 4294901760
        %v392 = vsub.f32 %v390, %v391
        %v393 = vand.u32 %v392, 4294901760
        %394 = vmatmul.mubr.f32.gmra.mrb[0].mxu0 %v393
        %v395 = vpop.f32.mrb[0].mxu0
        %v396 = vadd.f32 %v315, %v395
        %v397 = vpop.f32.mrb[0].mxu0
        %398 = vdwg.mxu0
        %399 = vmatprep.subr.mxu0 0.0
        %v400 = vand.u32 %v306, 4294901760
        %v401 = vsub.f32 %v306, %v400
        %v402 = vand.u32 %v401, 4294901760
        %v403 = vsub.f32 %v401, %v402
        %v404 = vand.u32 %v403, 4294901760
        %405 = vmatpush1.msra.mxu0 %v404
        %406 = vmatprep.subr.mxu0 0.0
        %v407 = vand.u32 %v307, 4294901760
        %v408 = vsub.f32 %v307, %v407
        %v409 = vand.u32 %v408, 4294901760
        %v410 = vsub.f32 %v408, %v409
        %v411 = vand.u32 %v410, 4294901760
        %412 = vmatpush1.msra.mxu0 %v411
        %413 = vmatprep.subr.mxu0 0.0
        %v414 = vand.u32 %v308, 4294901760
        %v415 = vsub.f32 %v308, %v414
        %v416 = vand.u32 %v415, 4294901760
        %v417 = vsub.f32 %v415, %v416
        %v418 = vand.u32 %v417, 4294901760
        %419 = vmatpush1.msra.mxu0 %v418
        %420 = vmatprep.subr.mxu0 0.0
        %v421 = vand.u32 %v309, 4294901760
        %v422 = vsub.f32 %v309, %v421
        %v423 = vand.u32 %v422, 4294901760
        %v424 = vsub.f32 %v422, %v423
        %v425 = vand.u32 %v424, 4294901760
        %426 = vmatpush1.msra.mxu0 %v425
        %427 = vmatprep.subr.mxu0 0.0
        %428 = vmatpush1.msra.mxu0 0.0
        %429 = vmatprep.subr.mxu0 0.0
        %430 = vmatpush1.msra.mxu0 0.0
        %431 = vmatprep.subr.mxu0 0.0
        %432 = vmatpush1.msra.mxu0 0.0
        %433 = vmatprep.subr.mxu0 0.0
        %434 = vmatpush1.msra.mxu0 0.0
        %435 = vmatprep.subr.mxu0 0.0
        %436 = vmatpush1.msra.mxu0 0.0
        %437 = vmatprep.subr.mxu0 0.0
        %438 = vmatpush1.msra.mxu0 0.0
        %439 = vmatprep.subr.mxu0 0.0
        %440 = vmatpush1.msra.mxu0 0.0
        %441 = vmatprep.subr.mxu0 0.0
        %442 = vmatpush1.msra.mxu0 0.0
        %443 = vmatprep.subr.mxu0 0.0
        %444 = vmatpush1.msra.mxu0 0.0
        %445 = vmatprep.subr.mxu0 0.0
        %446 = vmatpush1.msra.mxu0 0.0
        %447 = vmatprep.subr.mxu0 0.0
        %448 = vmatpush1.msra.mxu0 0.0
        %449 = vmatprep.subr.mxu0 0.0
        %450 = vmatpush1.msra.mxu0 0.0
        %451 = vmatprep.subr.mxu0 0.0
        %452 = vmatpush1.msra.mxu0 0.0
        %453 = vmatprep.subr.mxu0 0.0
        %454 = vmatpush1.msra.mxu0 0.0
        %455 = vmatprep.subr.mxu0 0.0
        %456 = vmatpush1.msra.mxu0 0.0
        %457 = vmatprep.subr.mxu0 0.0
        %458 = vmatpush1.msra.mxu0 0.0
        %459 = vmatprep.subr.mxu0 0.0
        %460 = vmatpush1.msra.mxu0 0.0
        %461 = vmatprep.subr.mxu0 0.0
        %462 = vmatpush1.msra.mxu0 0.0
        %463 = vmatprep.subr.mxu0 0.0
        %464 = vmatpush1.msra.mxu0 0.0
        %465 = vmatprep.subr.mxu0 0.0
        %466 = vmatpush1.msra.mxu0 0.0
        %467 = vmatprep.subr.mxu0 0.0
        %468 = vmatpush1.msra.mxu0 0.0
        %469 = vmatprep.subr.mxu0 0.0
        %470 = vmatpush1.msra.mxu0 0.0
        %471 = vmatprep.subr.mxu0 0.0
        %472 = vmatpush1.msra.mxu0 0.0
        %473 = vmatprep.subr.mxu0 0.0
        %474 = vmatpush1.msra.mxu0 0.0
        %475 = vmatprep.subr.mxu0 0.0
        %476 = vmatpush1.msra.mxu0 0.0
        %477 = vmatprep.subr.mxu0 0.0
        %478 = vmatpush1.msra.mxu0 0.0
        %479 = vmatprep.subr.mxu0 0.0
        %480 = vmatpush1.msra.mxu0 0.0
        %481 = vmatprep.subr.mxu0 0.0
        %482 = vmatpush1.msra.mxu0 0.0
        %483 = vmatprep.mubr.f32.mxu0 0.0
        %v484 = vand.u32 %v318, 4294901760
        %485 = vmatmul.mubr.f32.gmra.mrb[0].mxu0 %v484
        %v486 = vpop.f32.mrb[0].mxu0
        %v487 = vadd.f32 %v396, %v486
        %v488 = vpop.f32.mrb[0].mxu0
        %489 = vdwg.mxu0
        %490 = vmatprep.subr.mxu0 0.0
        %v491 = vand.u32 %v306, 4294901760
        %v492 = vsub.f32 %v306, %v491
        %493 = vmatpush1.msra.mxu0 %v492
        %494 = vmatprep.subr.mxu0 0.0
        %v495 = vand.u32 %v307, 4294901760
        %v496 = vsub.f32 %v307, %v495
        %497 = vmatpush1.msra.mxu0 %v496
        %498 = vmatprep.subr.mxu0 0.0
        %v499 = vand.u32 %v308, 4294901760
        %v500 = vsub.f32 %v308, %v499
        %501 = vmatpush1.msra.mxu0 %v500
        %502 = vmatprep.subr.mxu0 0.0
        %v503 = vand.u32 %v309, 4294901760
        %v504 = vsub.f32 %v309, %v503
        %505 = vmatpush1.msra.mxu0 %v504
        %506 = vmatprep.subr.mxu0 0.0
        %507 = vmatpush1.msra.mxu0 0.0
        %508 = vmatprep.subr.mxu0 0.0
        %509 = vmatpush1.msra.mxu0 0.0
        %510 = vmatprep.subr.mxu0 0.0
        %511 = vmatpush1.msra.mxu0 0.0
        %512 = vmatprep.subr.mxu0 0.0
        %513 = vmatpush1.msra.mxu0 0.0
        %514 = vmatprep.subr.mxu0 0.0
        %515 = vmatpush1.msra.mxu0 0.0
        %516 = vmatprep.subr.mxu0 0.0
        %517 = vmatpush1.msra.mxu0 0.0
        %518 = vmatprep.subr.mxu0 0.0
        %519 = vmatpush1.msra.mxu0 0.0
        %520 = vmatprep.subr.mxu0 0.0
        %521 = vmatpush1.msra.mxu0 0.0
        %522 = vmatprep.subr.mxu0 0.0
        %523 = vmatpush1.msra.mxu0 0.0
        %524 = vmatprep.subr.mxu0 0.0
        %525 = vmatpush1.msra.mxu0 0.0
        %526 = vmatprep.subr.mxu0 0.0
        %527 = vmatpush1.msra.mxu0 0.0
        %528 = vmatprep.subr.mxu0 0.0
        %529 = vmatpush1.msra.mxu0 0.0
        %530 = vmatprep.subr.mxu0 0.0
        %531 = vmatpush1.msra.mxu0 0.0
        %532 = vmatprep.subr.mxu0 0.0
        %533 = vmatpush1.msra.mxu0 0.0
        %534 = vmatprep.subr.mxu0 0.0
        %535 = vmatpush1.msra.mxu0 0.0
        %536 = vmatprep.subr.mxu0 0.0
        %537 = vmatpush1.msra.mxu0 0.0
        %538 = vmatprep.subr.mxu0 0.0
        %539 = vmatpush1.msra.mxu0 0.0
        %540 = vmatprep.subr.mxu0 0.0
        %541 = vmatpush1.msra.mxu0 0.0
        %542 = vmatprep.subr.mxu0 0.0
        %543 = vmatpush1.msra.mxu0 0.0
        %544 = vmatprep.subr.mxu0 0.0
        %545 = vmatpush1.msra.mxu0 0.0
        %546 = vmatprep.subr.mxu0 0.0
        %547 = vmatpush1.msra.mxu0 0.0
        %548 = vmatprep.subr.mxu0 0.0
        %549 = vmatpush1.msra.mxu0 0.0
        %550 = vmatprep.subr.mxu0 0.0
        %551 = vmatpush1.msra.mxu0 0.0
        %552 = vmatprep.subr.mxu0 0.0
        %553 = vmatpush1.msra.mxu0 0.0
        %554 = vmatprep.subr.mxu0 0.0
        %555 = vmatpush1.msra.mxu0 0.0
        %556 = vmatprep.subr.mxu0 0.0
        %557 = vmatpush1.msra.mxu0 0.0
        %558 = vmatprep.subr.mxu0 0.0
        %559 = vmatpush1.msra.mxu0 0.0
        %560 = vmatprep.subr.mxu0 0.0
        %561 = vmatpush1.msra.mxu0 0.0
        %562 = vmatprep.mubr.f32.mxu0 0.0
        %v563 = vand.u32 %v318, 4294901760
        %v564 = vsub.f32 %v318, %v563
        %565 = vmatmul.mubr.f32.gmra.mrb[0].mxu0 %v564
        %v566 = vpop.f32.mrb[0].mxu0
        %v567 = vadd.f32 %v487, %v566
        %v568 = vpop.f32.mrb[0].mxu0
        %569 = vdwg.mxu0
        %570 = vmatprep.subr.mxu0 0.0
        %v571 = vand.u32 %v306, 4294901760
        %572 = vmatpush1.msra.mxu0 %v571
        %573 = vmatprep.subr.mxu0 0.0
        %v574 = vand.u32 %v307, 4294901760
        %575 = vmatpush1.msra.mxu0 %v574
        %576 = vmatprep.subr.mxu0 0.0
        %v577 = vand.u32 %v308, 4294901760
        %578 = vmatpush1.msra.mxu0 %v577
        %579 = vmatprep.subr.mxu0 0.0
        %v580 = vand.u32 %v309, 4294901760
        %581 = vmatpush1.msra.mxu0 %v580
        %582 = vmatprep.subr.mxu0 0.0
        %583 = vmatpush1.msra.mxu0 0.0
        %584 = vmatprep.subr.mxu0 0.0
        %585 = vmatpush1.msra.mxu0 0.0
        %586 = vmatprep.subr.mxu0 0.0
        %587 = vmatpush1.msra.mxu0 0.0
        %588 = vmatprep.subr.mxu0 0.0
        %589 = vmatpush1.msra.mxu0 0.0
        %590 = vmatprep.subr.mxu0 0.0
        %591 = vmatpush1.msra.mxu0 0.0
        %592 = vmatprep.subr.mxu0 0.0
        %593 = vmatpush1.msra.mxu0 0.0
        %594 = vmatprep.subr.mxu0 0.0
        %595 = vmatpush1.msra.mxu0 0.0
        %596 = vmatprep.subr.mxu0 0.0
        %597 = vmatpush1.msra.mxu0 0.0
        %598 = vmatprep.subr.mxu0 0.0
        %599 = vmatpush1.msra.mxu0 0.0
        %600 = vmatprep.subr.mxu0 0.0
        %601 = vmatpush1.msra.mxu0 0.0
        %602 = vmatprep.subr.mxu0 0.0
        %603 = vmatpush1.msra.mxu0 0.0
        %604 = vmatprep.subr.mxu0 0.0
        %605 = vmatpush1.msra.mxu0 0.0
        %606 = vmatprep.subr.mxu0 0.0
        %607 = vmatpush1.msra.mxu0 0.0
        %608 = vmatprep.subr.mxu0 0.0
        %609 = vmatpush1.msra.mxu0 0.0
        %610 = vmatprep.subr.mxu0 0.0
        %611 = vmatpush1.msra.mxu0 0.0
        %612 = vmatprep.subr.mxu0 0.0
        %613 = vmatpush1.msra.mxu0 0.0
        %614 = vmatprep.subr.mxu0 0.0
        %615 = vmatpush1.msra.mxu0 0.0
        %616 = vmatprep.subr.mxu0 0.0
        %617 = vmatpush1.msra.mxu0 0.0
        %618 = vmatprep.subr.mxu0 0.0
        %619 = vmatpush1.msra.mxu0 0.0
        %620 = vmatprep.subr.mxu0 0.0
        %621 = vmatpush1.msra.mxu0 0.0
        %622 = vmatprep.subr.mxu0 0.0
        %623 = vmatpush1.msra.mxu0 0.0
        %624 = vmatprep.subr.mxu0 0.0
        %625 = vmatpush1.msra.mxu0 0.0
        %626 = vmatprep.subr.mxu0 0.0
        %627 = vmatpush1.msra.mxu0 0.0
        %628 = vmatprep.subr.mxu0 0.0
        %629 = vmatpush1.msra.mxu0 0.0
        %630 = vmatprep.subr.mxu0 0.0
        %631 = vmatpush1.msra.mxu0 0.0
        %632 = vmatprep.subr.mxu0 0.0
        %633 = vmatpush1.msra.mxu0 0.0
        %634 = vmatprep.subr.mxu0 0.0
        %635 = vmatpush1.msra.mxu0 0.0
        %636 = vmatprep.subr.mxu0 0.0
        %637 = vmatpush1.msra.mxu0 0.0
        %638 = vmatprep.mubr.f32.mxu0 0.0
        %v639 = vand.u32 %v318, 4294901760
        %v640 = vsub.f32 %v318, %v639
        %v641 = vand.u32 %v640, 4294901760
        %642 = vmatmul.mubr.f32.gmra.mrb[0].mxu0 %v641
        %v643 = vpop.f32.mrb[0].mxu0
        %v644 = vadd.f32 %v567, %v643
        %v645 = vpop.f32.mrb[0].mxu0
        %646 = vdwg.mxu0
        %647 = vmatprep.subr.mxu0 0.0
        %v648 = vand.u32 %v306, 4294901760
        %v649 = vsub.f32 %v306, %v648
        %v650 = vand.u32 %v649, 4294901760
        %651 = vmatpush1.msra.mxu0 %v650
        %652 = vmatprep.subr.mxu0 0.0
        %v653 = vand.u32 %v307, 4294901760
        %v654 = vsub.f32 %v307, %v653
        %v655 = vand.u32 %v654, 4294901760
        %656 = vmatpush1.msra.mxu0 %v655
        %657 = vmatprep.subr.mxu0 0.0
        %v658 = vand.u32 %v308, 4294901760
        %v659 = vsub.f32 %v308, %v658
        %v660 = vand.u32 %v659, 4294901760
        %661 = vmatpush1.msra.mxu0 %v660
        %662 = vmatprep.subr.mxu0 0.0
        %v663 = vand.u32 %v309, 4294901760
        %v664 = vsub.f32 %v309, %v663
        %v665 = vand.u32 %v664, 4294901760
        %666 = vmatpush1.msra.mxu0 %v665
        %667 = vmatprep.subr.mxu0 0.0
        %668 = vmatpush1.msra.mxu0 0.0
        %669 = vmatprep.subr.mxu0 0.0
        %670 = vmatpush1.msra.mxu0 0.0
        %671 = vmatprep.subr.mxu0 0.0
        %672 = vmatpush1.msra.mxu0 0.0
        %673 = vmatprep.subr.mxu0 0.0
        %674 = vmatpush1.msra.mxu0 0.0
        %675 = vmatprep.subr.mxu0 0.0
        %676 = vmatpush1.msra.mxu0 0.0
        %677 = vmatprep.subr.mxu0 0.0
        %678 = vmatpush1.msra.mxu0 0.0
        %679 = vmatprep.subr.mxu0 0.0
        %680 = vmatpush1.msra.mxu0 0.0
        %681 = vmatprep.subr.mxu0 0.0
        %682 = vmatpush1.msra.mxu0 0.0
        %683 = vmatprep.subr.mxu0 0.0
        %684 = vmatpush1.msra.mxu0 0.0
        %685 = vmatprep.subr.mxu0 0.0
        %686 = vmatpush1.msra.mxu0 0.0
        %687 = vmatprep.subr.mxu0 0.0
        %688 = vmatpush1.msra.mxu0 0.0
        %689 = vmatprep.subr.mxu0 0.0
        %690 = vmatpush1.msra.mxu0 0.0
        %691 = vmatprep.subr.mxu0 0.0
        %692 = vmatpush1.msra.mxu0 0.0
        %693 = vmatprep.subr.mxu0 0.0
        %694 = vmatpush1.msra.mxu0 0.0
        %695 = vmatprep.subr.mxu0 0.0
        %696 = vmatpush1.msra.mxu0 0.0
        %697 = vmatprep.subr.mxu0 0.0
        %698 = vmatpush1.msra.mxu0 0.0
        %699 = vmatprep.subr.mxu0 0.0
        %700 = vmatpush1.msra.mxu0 0.0
        %701 = vmatprep.subr.mxu0 0.0
        %702 = vmatpush1.msra.mxu0 0.0
        %703 = vmatprep.subr.mxu0 0.0
        %704 = vmatpush1.msra.mxu0 0.0
        %705 = vmatprep.subr.mxu0 0.0
        %706 = vmatpush1.msra.mxu0 0.0
        %707 = vmatprep.subr.mxu0 0.0
        %708 = vmatpush1.msra.mxu0 0.0
        %709 = vmatprep.subr.mxu0 0.0
        %710 = vmatpush1.msra.mxu0 0.0
        %711 = vmatprep.subr.mxu0 0.0
        %712 = vmatpush1.msra.mxu0 0.0
        %713 = vmatprep.subr.mxu0 0.0
        %714 = vmatpush1.msra.mxu0 0.0
        %715 = vmatprep.subr.mxu0 0.0
        %716 = vmatpush1.msra.mxu0 0.0
        %717 = vmatprep.subr.mxu0 0.0
        %718 = vmatpush1.msra.mxu0 0.0
        %719 = vmatprep.subr.mxu0 0.0
        %720 = vmatpush1.msra.mxu0 0.0
        %721 = vmatprep.subr.mxu0 0.0
        %722 = vmatpush1.msra.mxu0 0.0
        %723 = vmatprep.mubr.f32.mxu0 0.0
        %v724 = vand.u32 %v318, 4294901760
        %725 = vmatmul.mubr.f32.gmra.mrb[0].mxu0 %v724
        %v726 = vpop.f32.mrb[0].mxu0
        %v727 = vadd.f32 %v644, %v726
        %v728 = vpop.f32.mrb[0].mxu0
        %729 = vdwg.mxu0
        %730 = vmatprep.subr.mxu0 0.0
        %v731 = vand.u32 %v306, 4294901760
        %732 = vmatpush1.msra.mxu0 %v731
        %733 = vmatprep.subr.mxu0 0.0
        %v734 = vand.u32 %v307, 4294901760
        %735 = vmatpush1.msra.mxu0 %v734
        %736 = vmatprep.subr.mxu0 0.0
        %v737 = vand.u32 %v308, 4294901760
        %738 = vmatpush1.msra.mxu0 %v737
        %739 = vmatprep.subr.mxu0 0.0
        %v740 = vand.u32 %v309, 4294901760
        %741 = vmatpush1.msra.mxu0 %v740
        %742 = vmatprep.subr.mxu0 0.0
        %743 = vmatpush1.msra.mxu0 0.0
        %744 = vmatprep.subr.mxu0 0.0
        %745 = vmatpush1.msra.mxu0 0.0
        %746 = vmatprep.subr.mxu0 0.0
        %747 = vmatpush1.msra.mxu0 0.0
        %748 = vmatprep.subr.mxu0 0.0
        %749 = vmatpush1.msra.mxu0 0.0
        %750 = vmatprep.subr.mxu0 0.0
        %751 = vmatpush1.msra.mxu0 0.0
        %752 = vmatprep.subr.mxu0 0.0
        %753 = vmatpush1.msra.mxu0 0.0
        %754 = vmatprep.subr.mxu0 0.0
        %755 = vmatpush1.msra.mxu0 0.0
        %756 = vmatprep.subr.mxu0 0.0
        %757 = vmatpush1.msra.mxu0 0.0
        %758 = vmatprep.subr.mxu0 0.0
        %759 = vmatpush1.msra.mxu0 0.0
        %760 = vmatprep.subr.mxu0 0.0
        %761 = vmatpush1.msra.mxu0 0.0
        %762 = vmatprep.subr.mxu0 0.0
        %763 = vmatpush1.msra.mxu0 0.0
        %764 = vmatprep.subr.mxu0 0.0
        %765 = vmatpush1.msra.mxu0 0.0
        %766 = vmatprep.subr.mxu0 0.0
        %767 = vmatpush1.msra.mxu0 0.0
        %768 = vmatprep.subr.mxu0 0.0
        %769 = vmatpush1.msra.mxu0 0.0
        %770 = vmatprep.subr.mxu0 0.0
        %771 = vmatpush1.msra.mxu0 0.0
        %772 = vmatprep.subr.mxu0 0.0
        %773 = vmatpush1.msra.mxu0 0.0
        %774 = vmatprep.subr.mxu0 0.0
        %775 = vmatpush1.msra.mxu0 0.0
        %776 = vmatprep.subr.mxu0 0.0
        %777 = vmatpush1.msra.mxu0 0.0
        %778 = vmatprep.subr.mxu0 0.0
        %779 = vmatpush1.msra.mxu0 0.0
        %780 = vmatprep.subr.mxu0 0.0
        %781 = vmatpush1.msra.mxu0 0.0
        %782 = vmatprep.subr.mxu0 0.0
        %783 = vmatpush1.msra.mxu0 0.0
        %784 = vmatprep.subr.mxu0 0.0
        %785 = vmatpush1.msra.mxu0 0.0
        %786 = vmatprep.subr.mxu0 0.0
        %787 = vmatpush1.msra.mxu0 0.0
        %788 = vmatprep.subr.mxu0 0.0
        %789 = vmatpush1.msra.mxu0 0.0
        %790 = vmatprep.subr.mxu0 0.0
        %791 = vmatpush1.msra.mxu0 0.0
        %792 = vmatprep.subr.mxu0 0.0
        %793 = vmatpush1.msra.mxu0 0.0
        %794 = vmatprep.subr.mxu0 0.0
        %795 = vmatpush1.msra.mxu0 0.0
        %796 = vmatprep.subr.mxu0 0.0
        %797 = vmatpush1.msra.mxu0 0.0
        %798 = vmatprep.mubr.f32.mxu0 0.0
        %v799 = vand.u32 %v318, 4294901760
        %800 = vmatmul.mubr.f32.gmra.mrb[0].mxu0 %v799
        %v801 = vpop.f32.mrb[0].mxu0
        %v802 = vadd.f32 %v727, %v801
        %v803 = vpop.f32.mrb[0].mxu0
        %804 = vdwg.mxu0
        %v805 = vmax.f32 %v802, 0.0
        %v806 = vld [vmem:[%s5] sm:$0xff]
        %v807 = vld [vmem:[%s5 + $0x8] sm:$0xff]
        %v808 = vld [vmem:[%s5 + $0x10] sm:$0xff]
        %v809 = vld [vmem:[%s5 + $0x18] sm:$0xff]
        %v810 = vld [vmem:[%s5 + $0x20] sm:$0xff]
        %v811 = vld [vmem:[%s5 + $0x28] sm:$0xff]
        %v812 = vld [vmem:[%s5 + $0x30] sm:$0xff]
        %v813 = vld [vmem:[%s5 + $0x38] sm:$0xff]
        %v814 = vld [vmem:[%s5 + $0x40] sm:$0xff]
        %v815 = vld [vmem:[%s5 + $0x48] sm:$0xff]
        %v816 = vld [vmem:[%s5 + $0x50] sm:$0xff]
        %v817 = vld [vmem:[%s5 + $0x58] sm:$0xff]
        %v818 = vld [vmem:[%s5 + $0x60] sm:$0xff]
        %v819 = vld [vmem:[%s5 + $0x68] sm:$0xff]
        %v820 = vld [vmem:[%s5 + $0x70] sm:$0xff]
        %v821 = vld [vmem:[%s5 + $0x78] sm:$0xff]
        %v822 = vld [vmem:[%s6] sm:$0x1]
        %v824 = vlaneseq
        %v825 = vshrl.u32 %v824, 7
        %v826 = vsub.s32 0, %v825
        %v827 = vrot.slane %v822, %v826
        %829 = vmatprep.subr.mxu0 0.0
        %v830 = vand.u32 %v806, 4294901760
        %831 = vmatpush1.msra.mxu0 %v830
        %832 = vmatprep.subr.mxu0 0.0
        %v833 = vand.u32 %v807, 4294901760
        %834 = vmatpush1.msra.mxu0 %v833
        %835 = vmatprep.subr.mxu0 0.0
        %v836 = vand.u32 %v808, 4294901760
        %837 = vmatpush1.msra.mxu0 %v836
        %838 = vmatprep.subr.mxu0 0.0
        %v839 = vand.u32 %v809, 4294901760
        %840 = vmatpush1.msra.mxu0 %v839
        %841 = vmatprep.subr.mxu0 0.0
        %v842 = vand.u32 %v810, 4294901760
        %843 = vmatpush1.msra.mxu0 %v842
        %844 = vmatprep.subr.mxu0 0.0
        %v845 = vand.u32 %v811, 4294901760
        %846 = vmatpush1.msra.mxu0 %v845
        %847 = vmatprep.subr.mxu0 0.0
        %v848 = vand.u32 %v812, 4294901760
        %849 = vmatpush1.msra.mxu0 %v848
        %850 = vmatprep.subr.mxu0 0.0
        %v851 = vand.u32 %v813, 4294901760
        %852 = vmatpush1.msra.mxu0 %v851
        %853 = vmatprep.subr.mxu0 0.0
        %v854 = vand.u32 %v814, 4294901760
        %855 = vmatpush1.msra.mxu0 %v854
        %856 = vmatprep.subr.mxu0 0.0
        %v857 = vand.u32 %v815, 4294901760
        %858 = vmatpush1.msra.mxu0 %v857
        %859 = vmatprep.subr.mxu0 0.0
        %v860 = vand.u32 %v816, 4294901760
        %861 = vmatpush1.msra.mxu0 %v860
        %862 = vmatprep.subr.mxu0 0.0
        %v863 = vand.u32 %v817, 4294901760
        %864 = vmatpush1.msra.mxu0 %v863
        %865 = vmatprep.subr.mxu0 0.0
        %v866 = vand.u32 %v818, 4294901760
        %867 = vmatpush1.msra.mxu0 %v866
        %868 = vmatprep.subr.mxu0 0.0
        %v869 = vand.u32 %v819, 4294901760
        %870 = vmatpush1.msra.mxu0 %v869
        %871 = vmatprep.subr.mxu0 0.0
        %v872 = vand.u32 %v820, 4294901760
        %873 = vmatpush1.msra.mxu0 %v872
        %874 = vmatprep.subr.mxu0 0.0
        %v875 = vand.u32 %v821, 4294901760
        %876 = vmatpush1.msra.mxu0 %v875
        %877 = vmatprep.subr.mxu0 0.0
        %878 = vmatpush1.msra.mxu0 0.0
        %879 = vmatprep.subr.mxu0 0.0
        %880 = vmatpush1.msra.mxu0 0.0
        %881 = vmatprep.subr.mxu0 0.0
        %882 = vmatpush1.msra.mxu0 0.0
        %883 = vmatprep.subr.mxu0 0.0
        %884 = vmatpush1.msra.mxu0 0.0
        %885 = vmatprep.subr.mxu0 0.0
        %886 = vmatpush1.msra.mxu0 0.0
        %887 = vmatprep.subr.mxu0 0.0
        %888 = vmatpush1.msra.mxu0 0.0
        %889 = vmatprep.subr.mxu0 0.0
        %890 = vmatpush1.msra.mxu0 0.0
        %891 = vmatprep.subr.mxu0 0.0
        %892 = vmatpush1.msra.mxu0 0.0
        %893 = vmatprep.subr.mxu0 0.0
        %894 = vmatpush1.msra.mxu0 0.0
        %895 = vmatprep.subr.mxu0 0.0
        %896 = vmatpush1.msra.mxu0 0.0
        %897 = vmatprep.subr.mxu0 0.0
        %898 = vmatpush1.msra.mxu0 0.0
        %899 = vmatprep.subr.mxu0 0.0
        %900 = vmatpush1.msra.mxu0 0.0
        %901 = vmatprep.subr.mxu0 0.0
        %902 = vmatpush1.msra.mxu0 0.0
        %903 = vmatprep.subr.mxu0 0.0
        %904 = vmatpush1.msra.mxu0 0.0
        %905 = vmatprep.subr.mxu0 0.0
        %906 = vmatpush1.msra.mxu0 0.0
        %907 = vmatprep.subr.mxu0 0.0
        %908 = vmatpush1.msra.mxu0 0.0
        %909 = vmatprep.mubr.f32.mxu0 0.0
        %v910 = vand.u32 %v805, 4294901760
        %v911 = vsub.f32 %v805, %v910
        %v912 = vand.u32 %v911, 4294901760
        %v913 = vsub.f32 %v911, %v912
        %v914 = vand.u32 %v913, 4294901760
        %915 = vmatmul.mubr.f32.gmra.mrb[0].mxu0 %v914
        %v916 = vpop.f32.mrb[0].mxu0
        %v917 = vadd.f32 %v827, %v916
        %v918 = vpop.f32.mrb[0].mxu0
        %919 = vdwg.mxu0
        %920 = vmatprep.subr.mxu0 0.0
        %v921 = vand.u32 %v806, 4294901760
        %v922 = vsub.f32 %v806, %v921
        %v923 = vand.u32 %v922, 4294901760
        %v924 = vsub.f32 %v922, %v923
        %v925 = vand.u32 %v924, 4294901760
        %926 = vmatpush1.msra.mxu0 %v925
        %927 = vmatprep.subr.mxu0 0.0
        %v928 = vand.u32 %v807, 4294901760
        %v929 = vsub.f32 %v807, %v928
        %v930 = vand.u32 %v929, 4294901760
        %v931 = vsub.f32 %v929, %v930
        %v932 = vand.u32 %v931, 4294901760
        %933 = vmatpush1.msra.mxu0 %v932
        %934 = vmatprep.subr.mxu0 0.0
        %v935 = vand.u32 %v808, 4294901760
        %v936 = vsub.f32 %v808, %v935
        %v937 = vand.u32 %v936, 4294901760
        %v938 = vsub.f32 %v936, %v937
        %v939 = vand.u32 %v938, 4294901760
        %940 = vmatpush1.msra.mxu0 %v939
        %941 = vmatprep.subr.mxu0 0.0
        %v942 = vand.u32 %v809, 4294901760
        %v943 = vsub.f32 %v809, %v942
        %v944 = vand.u32 %v943, 4294901760
        %v945 = vsub.f32 %v943, %v944
        %v946 = vand.u32 %v945, 4294901760
        %947 = vmatpush1.msra.mxu0 %v946
        %948 = vmatprep.subr.mxu0 0.0
        %v949 = vand.u32 %v810, 4294901760
        %v950 = vsub.f32 %v810, %v949
        %v951 = vand.u32 %v950, 4294901760
        %v952 = vsub.f32 %v950, %v951
        %v953 = vand.u32 %v952, 4294901760
        %954 = vmatpush1.msra.mxu0 %v953
        %955 = vmatprep.subr.mxu0 0.0
        %v956 = vand.u32 %v811, 4294901760
        %v957 = vsub.f32 %v811, %v956
        %v958 = vand.u32 %v957, 4294901760
        %v959 = vsub.f32 %v957, %v958
        %v960 = vand.u32 %v959, 4294901760
        %961 = vmatpush1.msra.mxu0 %v960
        %962 = vmatprep.subr.mxu0 0.0
        %v963 = vand.u32 %v812, 4294901760
        %v964 = vsub.f32 %v812, %v963
        %v965 = vand.u32 %v964, 4294901760
        %v966 = vsub.f32 %v964, %v965
        %v967 = vand.u32 %v966, 4294901760
        %968 = vmatpush1.msra.mxu0 %v967
        %969 = vmatprep.subr.mxu0 0.0
        %v970 = vand.u32 %v813, 4294901760
        %v971 = vsub.f32 %v813, %v970
        %v972 = vand.u32 %v971, 4294901760
        %v973 = vsub.f32 %v971, %v972
        %v974 = vand.u32 %v973, 4294901760
        %975 = vmatpush1.msra.mxu0 %v974
        %976 = vmatprep.subr.mxu0 0.0
        %v977 = vand.u32 %v814, 4294901760
        %v978 = vsub.f32 %v814, %v977
        %v979 = vand.u32 %v978, 4294901760
        %v980 = vsub.f32 %v978, %v979
        %v981 = vand.u32 %v980, 4294901760
        %982 = vmatpush1.msra.mxu0 %v981
        %983 = vmatprep.subr.mxu0 0.0
        %v984 = vand.u32 %v815, 4294901760
        %v985 = vsub.f32 %v815, %v984
        %v986 = vand.u32 %v985, 4294901760
        %v987 = vsub.f32 %v985, %v986
        %v988 = vand.u32 %v987, 4294901760
        %989 = vmatpush1.msra.mxu0 %v988
        %990 = vmatprep.subr.mxu0 0.0
        %v991 = vand.u32 %v816, 4294901760
        %v992 = vsub.f32 %v816, %v991
        %v993 = vand.u32 %v992, 4294901760
        %v994 = vsub.f32 %v992, %v993
        %v995 = vand.u32 %v994, 4294901760
        %996 = vmatpush1.msra.mxu0 %v995
        %997 = vmatprep.subr.mxu0 0.0
        %v998 = vand.u32 %v817, 4294901760
        %v999 = vsub.f32 %v817, %v998
        %v1000 = vand.u32 %v999, 4294901760
        %v1001 = vsub.f32 %v999, %v1000
        %v1002 = vand.u32 %v1001, 4294901760
        %1003 = vmatpush1.msra.mxu0 %v1002
        %1004 = vmatprep.subr.mxu0 0.0
        %v1005 = vand.u32 %v818, 4294901760
        %v1006 = vsub.f32 %v818, %v1005
        %v1007 = vand.u32 %v1006, 4294901760
        %v1008 = vsub.f32 %v1006, %v1007
        %v1009 = vand.u32 %v1008, 4294901760
        %1010 = vmatpush1.msra.mxu0 %v1009
        %1011 = vmatprep.subr.mxu0 0.0
        %v1012 = vand.u32 %v819, 4294901760
        %v1013 = vsub.f32 %v819, %v1012
        %v1014 = vand.u32 %v1013, 4294901760
        %v1015 = vsub.f32 %v1013, %v1014
        %v1016 = vand.u32 %v1015, 4294901760
        %1017 = vmatpush1.msra.mxu0 %v1016
        %1018 = vmatprep.subr.mxu0 0.0
        %v1019 = vand.u32 %v820, 4294901760
        %v1020 = vsub.f32 %v820, %v1019
        %v1021 = vand.u32 %v1020, 4294901760
        %v1022 = vsub.f32 %v1020, %v1021
        %v1023 = vand.u32 %v1022, 4294901760
        %1024 = vmatpush1.msra.mxu0 %v1023
        %1025 = vmatprep.subr.mxu0 0.0
        %v1026 = vand.u32 %v821, 4294901760
        %v1027 = vsub.f32 %v821, %v1026
        %v1028 = vand.u32 %v1027, 4294901760
        %v1029 = vsub.f32 %v1027, %v1028
        %v1030 = vand.u32 %v1029, 4294901760
        %1031 = vmatpush1.msra.mxu0 %v1030
        %1032 = vmatprep.subr.mxu0 0.0
        %1033 = vmatpush1.msra.mxu0 0.0
        %1034 = vmatprep.subr.mxu0 0.0
        %1035 = vmatpush1.msra.mxu0 0.0
        %1036 = vmatprep.subr.mxu0 0.0
        %1037 = vmatpush1.msra.mxu0 0.0
        %1038 = vmatprep.subr.mxu0 0.0
        %1039 = vmatpush1.msra.mxu0 0.0
        %1040 = vmatprep.subr.mxu0 0.0
        %1041 = vmatpush1.msra.mxu0 0.0
        %1042 = vmatprep.subr.mxu0 0.0
        %1043 = vmatpush1.msra.mxu0 0.0
        %1044 = vmatprep.subr.mxu0 0.0
        %1045 = vmatpush1.msra.mxu0 0.0
        %1046 = vmatprep.subr.mxu0 0.0
        %1047 = vmatpush1.msra.mxu0 0.0
        %1048 = vmatprep.subr.mxu0 0.0
        %1049 = vmatpush1.msra.mxu0 0.0
        %1050 = vmatprep.subr.mxu0 0.0
        %1051 = vmatpush1.msra.mxu0 0.0
        %1052 = vmatprep.subr.mxu0 0.0
        %1053 = vmatpush1.msra.mxu0 0.0
        %1054 = vmatprep.subr.mxu0 0.0
        %1055 = vmatpush1.msra.mxu0 0.0
        %1056 = vmatprep.subr.mxu0 0.0
        %1057 = vmatpush1.msra.mxu0 0.0
        %1058 = vmatprep.subr.mxu0 0.0
        %1059 = vmatpush1.msra.mxu0 0.0
        %1060 = vmatprep.subr.mxu0 0.0
        %1061 = vmatpush1.msra.mxu0 0.0
        %1062 = vmatprep.subr.mxu0 0.0
        %1063 = vmatpush1.msra.mxu0 0.0
        %1064 = vmatprep.mubr.f32.mxu0 0.0
        %v1065 = vand.u32 %v805, 4294901760
        %1066 = vmatmul.mubr.f32.gmra.mrb[0].mxu0 %v1065
        %v1067 = vpop.f32.mrb[0].mxu0
        %v1068 = vadd.f32 %v917, %v1067
        %v1069 = vpop.f32.mrb[0].mxu0
        %1070 = vdwg.mxu0
        %1071 = vmatprep.subr.mxu0 0.0
        %v1072 = vand.u32 %v806, 4294901760
        %v1073 = vsub.f32 %v806, %v1072
        %1074 = vmatpush1.msra.mxu0 %v1073
        %1075 = vmatprep.subr.mxu0 0.0
        %v1076 = vand.u32 %v807, 4294901760
        %v1077 = vsub.f32 %v807, %v1076
        %1078 = vmatpush1.msra.mxu0 %v1077
        %1079 = vmatprep.subr.mxu0 0.0
        %v1080 = vand.u32 %v808, 4294901760
        %v1081 = vsub.f32 %v808, %v1080
        %1082 = vmatpush1.msra.mxu0 %v1081
        %1083 = vmatprep.subr.mxu0 0.0
        %v1084 = vand.u32 %v809, 4294901760
        %v1085 = vsub.f32 %v809, %v1084
        %1086 = vmatpush1.msra.mxu0 %v1085
        %1087 = vmatprep.subr.mxu0 0.0
        %v1088 = vand.u32 %v810, 4294901760
        %v1089 = vsub.f32 %v810, %v1088
        %1090 = vmatpush1.msra.mxu0 %v1089
        %1091 = vmatprep.subr.mxu0 0.0
        %v1092 = vand.u32 %v811, 4294901760
        %v1093 = vsub.f32 %v811, %v1092
        %1094 = vmatpush1.msra.mxu0 %v1093
        %1095 = vmatprep.subr.mxu0 0.0
        %v1096 = vand.u32 %v812, 4294901760
        %v1097 = vsub.f32 %v812, %v1096
        %1098 = vmatpush1.msra.mxu0 %v1097
        %1099 = vmatprep.subr.mxu0 0.0
        %v1100 = vand.u32 %v813, 4294901760
        %v1101 = vsub.f32 %v813, %v1100
        %1102 = vmatpush1.msra.mxu0 %v1101
        %1103 = vmatprep.subr.mxu0 0.0
        %v1104 = vand.u32 %v814, 4294901760
        %v1105 = vsub.f32 %v814, %v1104
        %1106 = vmatpush1.msra.mxu0 %v1105
        %1107 = vmatprep.subr.mxu0 0.0
        %v1108 = vand.u32 %v815, 4294901760
        %v1109 = vsub.f32 %v815, %v1108
        %1110 = vmatpush1.msra.mxu0 %v1109
        %1111 = vmatprep.subr.mxu0 0.0
        %v1112 = vand.u32 %v816, 4294901760
        %v1113 = vsub.f32 %v816, %v1112
        %1114 = vmatpush1.msra.mxu0 %v1113
        %1115 = vmatprep.subr.mxu0 0.0
        %v1116 = vand.u32 %v817, 4294901760
        %v1117 = vsub.f32 %v817, %v1116
        %1118 = vmatpush1.msra.mxu0 %v1117
        %1119 = vmatprep.subr.mxu0 0.0
        %v1120 = vand.u32 %v818, 4294901760
        %v1121 = vsub.f32 %v818, %v1120
        %1122 = vmatpush1.msra.mxu0 %v1121
        %1123 = vmatprep.subr.mxu0 0.0
        %v1124 = vand.u32 %v819, 4294901760
        %v1125 = vsub.f32 %v819, %v1124
        %1126 = vmatpush1.msra.mxu0 %v1125
        %1127 = vmatprep.subr.mxu0 0.0
        %v1128 = vand.u32 %v820, 4294901760
        %v1129 = vsub.f32 %v820, %v1128
        %1130 = vmatpush1.msra.mxu0 %v1129
        %1131 = vmatprep.subr.mxu0 0.0
        %v1132 = vand.u32 %v821, 4294901760
        %v1133 = vsub.f32 %v821, %v1132
        %1134 = vmatpush1.msra.mxu0 %v1133
        %1135 = vmatprep.subr.mxu0 0.0
        %1136 = vmatpush1.msra.mxu0 0.0
        %1137 = vmatprep.subr.mxu0 0.0
        %1138 = vmatpush1.msra.mxu0 0.0
        %1139 = vmatprep.subr.mxu0 0.0
        %1140 = vmatpush1.msra.mxu0 0.0
        %1141 = vmatprep.subr.mxu0 0.0
        %1142 = vmatpush1.msra.mxu0 0.0
        %1143 = vmatprep.subr.mxu0 0.0
        %1144 = vmatpush1.msra.mxu0 0.0
        %1145 = vmatprep.subr.mxu0 0.0
        %1146 = vmatpush1.msra.mxu0 0.0
        %1147 = vmatprep.subr.mxu0 0.0
        %1148 = vmatpush1.msra.mxu0 0.0
        %1149 = vmatprep.subr.mxu0 0.0
        %1150 = vmatpush1.msra.mxu0 0.0
        %1151 = vmatprep.subr.mxu0 0.0
        %1152 = vmatpush1.msra.mxu0 0.0
        %1153 = vmatprep.subr.mxu0 0.0
        %1154 = vmatpush1.msra.mxu0 0.0
        %1155 = vmatprep.subr.mxu0 0.0
        %1156 = vmatpush1.msra.mxu0 0.0
        %1157 = vmatprep.subr.mxu0 0.0
        %1158 = vmatpush1.msra.mxu0 0.0
        %1159 = vmatprep.subr.mxu0 0.0
        %1160 = vmatpush1.msra.mxu0 0.0
        %1161 = vmatprep.subr.mxu0 0.0
        %1162 = vmatpush1.msra.mxu0 0.0
        %1163 = vmatprep.subr.mxu0 0.0
        %1164 = vmatpush1.msra.mxu0 0.0
        %1165 = vmatprep.subr.mxu0 0.0
        %1166 = vmatpush1.msra.mxu0 0.0
        %1167 = vmatprep.mubr.f32.mxu0 0.0
        %v1168 = vand.u32 %v805, 4294901760
        %v1169 = vsub.f32 %v805, %v1168
        %1170 = vmatmul.mubr.f32.gmra.mrb[0].mxu0 %v1169
        %v1171 = vpop.f32.mrb[0].mxu0
        %v1172 = vadd.f32 %v1068, %v1171
        %v1173 = vpop.f32.mrb[0].mxu0
        %1174 = vdwg.mxu0
        %1175 = vmatprep.subr.mxu0 0.0
        %v1176 = vand.u32 %v806, 4294901760
        %1177 = vmatpush1.msra.mxu0 %v1176
        %1178 = vmatprep.subr.mxu0 0.0
        %v1179 = vand.u32 %v807, 4294901760
        %1180 = vmatpush1.msra.mxu0 %v1179
        %1181 = vmatprep.subr.mxu0 0.0
        %v1182 = vand.u32 %v808, 4294901760
        %1183 = vmatpush1.msra.mxu0 %v1182
        %1184 = vmatprep.subr.mxu0 0.0
        %v1185 = vand.u32 %v809, 4294901760
        %1186 = vmatpush1.msra.mxu0 %v1185
        %1187 = vmatprep.subr.mxu0 0.0
        %v1188 = vand.u32 %v810, 4294901760
        %1189 = vmatpush1.msra.mxu0 %v1188
        %1190 = vmatprep.subr.mxu0 0.0
        %v1191 = vand.u32 %v811, 4294901760
        %1192 = vmatpush1.msra.mxu0 %v1191
        %1193 = vmatprep.subr.mxu0 0.0
        %v1194 = vand.u32 %v812, 4294901760
        %1195 = vmatpush1.msra.mxu0 %v1194
        %1196 = vmatprep.subr.mxu0 0.0
        %v1197 = vand.u32 %v813, 4294901760
        %1198 = vmatpush1.msra.mxu0 %v1197
        %1199 = vmatprep.subr.mxu0 0.0
        %v1200 = vand.u32 %v814, 4294901760
        %1201 = vmatpush1.msra.mxu0 %v1200
        %1202 = vmatprep.subr.mxu0 0.0
        %v1203 = vand.u32 %v815, 4294901760
        %1204 = vmatpush1.msra.mxu0 %v1203
        %1205 = vmatprep.subr.mxu0 0.0
        %v1206 = vand.u32 %v816, 4294901760
        %1207 = vmatpush1.msra.mxu0 %v1206
        %1208 = vmatprep.subr.mxu0 0.0
        %v1209 = vand.u32 %v817, 4294901760
        %1210 = vmatpush1.msra.mxu0 %v1209
        %1211 = vmatprep.subr.mxu0 0.0
        %v1212 = vand.u32 %v818, 4294901760
        %1213 = vmatpush1.msra.mxu0 %v1212
        %1214 = vmatprep.subr.mxu0 0.0
        %v1215 = vand.u32 %v819, 4294901760
        %1216 = vmatpush1.msra.mxu0 %v1215
        %1217 = vmatprep.subr.mxu0 0.0
        %v1218 = vand.u32 %v820, 4294901760
        %1219 = vmatpush1.msra.mxu0 %v1218
        %1220 = vmatprep.subr.mxu0 0.0
        %v1221 = vand.u32 %v821, 4294901760
        %1222 = vmatpush1.msra.mxu0 %v1221
        %1223 = vmatprep.subr.mxu0 0.0
        %1224 = vmatpush1.msra.mxu0 0.0
        %1225 = vmatprep.subr.mxu0 0.0
        %1226 = vmatpush1.msra.mxu0 0.0
        %1227 = vmatprep.subr.mxu0 0.0
        %1228 = vmatpush1.msra.mxu0 0.0
        %1229 = vmatprep.subr.mxu0 0.0
        %1230 = vmatpush1.msra.mxu0 0.0
        %1231 = vmatprep.subr.mxu0 0.0
        %1232 = vmatpush1.msra.mxu0 0.0
        %1233 = vmatprep.subr.mxu0 0.0
        %1234 = vmatpush1.msra.mxu0 0.0
        %1235 = vmatprep.subr.mxu0 0.0
        %1236 = vmatpush1.msra.mxu0 0.0
        %1237 = vmatprep.subr.mxu0 0.0
        %1238 = vmatpush1.msra.mxu0 0.0
        %1239 = vmatprep.subr.mxu0 0.0
        %1240 = vmatpush1.msra.mxu0 0.0
        %1241 = vmatprep.subr.mxu0 0.0
        %1242 = vmatpush1.msra.mxu0 0.0
        %1243 = vmatprep.subr.mxu0 0.0
        %1244 = vmatpush1.msra.mxu0 0.0
        %1245 = vmatprep.subr.mxu0 0.0
        %1246 = vmatpush1.msra.mxu0 0.0
        %1247 = vmatprep.subr.mxu0 0.0
        %1248 = vmatpush1.msra.mxu0 0.0
        %1249 = vmatprep.subr.mxu0 0.0
        %1250 = vmatpush1.msra.mxu0 0.0
        %1251 = vmatprep.subr.mxu0 0.0
        %1252 = vmatpush1.msra.mxu0 0.0
        %1253 = vmatprep.subr.mxu0 0.0
        %1254 = vmatpush1.msra.mxu0 0.0
        %1255 = vmatprep.mubr.f32.mxu0 0.0
        %v1256 = vand.u32 %v805, 4294901760
        %v1257 = vsub.f32 %v805, %v1256
        %v1258 = vand.u32 %v1257, 4294901760
        %1259 = vmatmul.mubr.f32.gmra.mrb[0].mxu0 %v1258
        %v1260 = vpop.f32.mrb[0].mxu0
        %v1261 = vadd.f32 %v1172, %v1260
        %v1262 = vpop.f32.mrb[0].mxu0
        %1263 = vdwg.mxu0
        %1264 = vmatprep.subr.mxu0 0.0
        %v1265 = vand.u32 %v806, 4294901760
        %v1266 = vsub.f32 %v806, %v1265
        %v1267 = vand.u32 %v1266, 4294901760
        %1268 = vmatpush1.msra.mxu0 %v1267
        %1269 = vmatprep.subr.mxu0 0.0
        %v1270 = vand.u32 %v807, 4294901760
        %v1271 = vsub.f32 %v807, %v1270
        %v1272 = vand.u32 %v1271, 4294901760
        %1273 = vmatpush1.msra.mxu0 %v1272
        %1274 = vmatprep.subr.mxu0 0.0
        %v1275 = vand.u32 %v808, 4294901760
        %v1276 = vsub.f32 %v808, %v1275
        %v1277 = vand.u32 %v1276, 4294901760
        %1278 = vmatpush1.msra.mxu0 %v1277
        %1279 = vmatprep.subr.mxu0 0.0
        %v1280 = vand.u32 %v809, 4294901760
        %v1281 = vsub.f32 %v809, %v1280
        %v1282 = vand.u32 %v1281, 4294901760
        %1283 = vmatpush1.msra.mxu0 %v1282
        %1284 = vmatprep.subr.mxu0 0.0
        %v1285 = vand.u32 %v810, 4294901760
        %v1286 = vsub.f32 %v810, %v1285
        %v1287 = vand.u32 %v1286, 4294901760
        %1288 = vmatpush1.msra.mxu0 %v1287
        %1289 = vmatprep.subr.mxu0 0.0
        %v1290 = vand.u32 %v811, 4294901760
        %v1291 = vsub.f32 %v811, %v1290
        %v1292 = vand.u32 %v1291, 4294901760
        %1293 = vmatpush1.msra.mxu0 %v1292
        %1294 = vmatprep.subr.mxu0 0.0
        %v1295 = vand.u32 %v812, 4294901760
        %v1296 = vsub.f32 %v812, %v1295
        %v1297 = vand.u32 %v1296, 4294901760
        %1298 = vmatpush1.msra.mxu0 %v1297
        %1299 = vmatprep.subr.mxu0 0.0
        %v1300 = vand.u32 %v813, 4294901760
        %v1301 = vsub.f32 %v813, %v1300
        %v1302 = vand.u32 %v1301, 4294901760
        %1303 = vmatpush1.msra.mxu0 %v1302
        %1304 = vmatprep.subr.mxu0 0.0
        %v1305 = vand.u32 %v814, 4294901760
        %v1306 = vsub.f32 %v814, %v1305
        %v1307 = vand.u32 %v1306, 4294901760
        %1308 = vmatpush1.msra.mxu0 %v1307
        %1309 = vmatprep.subr.mxu0 0.0
        %v1310 = vand.u32 %v815, 4294901760
        %v1311 = vsub.f32 %v815, %v1310
        %v1312 = vand.u32 %v1311, 4294901760
        %1313 = vmatpush1.msra.mxu0 %v1312
        %1314 = vmatprep.subr.mxu0 0.0
        %v1315 = vand.u32 %v816, 4294901760
        %v1316 = vsub.f32 %v816, %v1315
        %v1317 = vand.u32 %v1316, 4294901760
        %1318 = vmatpush1.msra.mxu0 %v1317
        %1319 = vmatprep.subr.mxu0 0.0
        %v1320 = vand.u32 %v817, 4294901760
        %v1321 = vsub.f32 %v817, %v1320
        %v1322 = vand.u32 %v1321, 4294901760
        %1323 = vmatpush1.msra.mxu0 %v1322
        %1324 = vmatprep.subr.mxu0 0.0
        %v1325 = vand.u32 %v818, 4294901760
        %v1326 = vsub.f32 %v818, %v1325
        %v1327 = vand.u32 %v1326, 4294901760
        %1328 = vmatpush1.msra.mxu0 %v1327
        %1329 = vmatprep.subr.mxu0 0.0
        %v1330 = vand.u32 %v819, 4294901760
        %v1331 = vsub.f32 %v819, %v1330
        %v1332 = vand.u32 %v1331, 4294901760
        %1333 = vmatpush1.msra.mxu0 %v1332
        %1334 = vmatprep.subr.mxu0 0.0
        %v1335 = vand.u32 %v820, 4294901760
        %v1336 = vsub.f32 %v820, %v1335
        %v1337 = vand.u32 %v1336, 4294901760
        %1338 = vmatpush1.msra.mxu0 %v1337
        %1339 = vmatprep.subr.mxu0 0.0
        %v1340 = vand.u32 %v821, 4294901760
        %v1341 = vsub.f32 %v821, %v1340
        %v1342 = vand.u32 %v1341, 4294901760
        %1343 = vmatpush1.msra.mxu0 %v1342
        %1344 = vmatprep.subr.mxu0 0.0
        %1345 = vmatpush1.msra.mxu0 0.0
        %1346 = vmatprep.subr.mxu0 0.0
        %1347 = vmatpush1.msra.mxu0 0.0
        %1348 = vmatprep.subr.mxu0 0.0
        %1349 = vmatpush1.msra.mxu0 0.0
        %1350 = vmatprep.subr.mxu0 0.0
        %1351 = vmatpush1.msra.mxu0 0.0
        %1352 = vmatprep.subr.mxu0 0.0
        %1353 = vmatpush1.msra.mxu0 0.0
        %1354 = vmatprep.subr.mxu0 0.0
        %1355 = vmatpush1.msra.mxu0 0.0
        %1356 = vmatprep.subr.mxu0 0.0
        %1357 = vmatpush1.msra.mxu0 0.0
        %1358 = vmatprep.subr.mxu0 0.0
        %1359 = vmatpush1.msra.mxu0 0.0
        %1360 = vmatprep.subr.mxu0 0.0
        %1361 = vmatpush1.msra.mxu0 0.0
        %1362 = vmatprep.subr.mxu0 0.0
        %1363 = vmatpush1.msra.mxu0 0.0
        %1364 = vmatprep.subr.mxu0 0.0
        %1365 = vmatpush1.msra.mxu0 0.0
        %1366 = vmatprep.subr.mxu0 0.0
        %1367 = vmatpush1.msra.mxu0 0.0
        %1368 = vmatprep.subr.mxu0 0.0
        %1369 = vmatpush1.msra.mxu0 0.0
        %1370 = vmatprep.subr.mxu0 0.0
        %1371 = vmatpush1.msra.mxu0 0.0
        %1372 = vmatprep.subr.mxu0 0.0
        %1373 = vmatpush1.msra.mxu0 0.0
        %1374 = vmatprep.subr.mxu0 0.0
        %1375 = vmatpush1.msra.mxu0 0.0
        %1376 = vmatprep.mubr.f32.mxu0 0.0
        %v1377 = vand.u32 %v805, 4294901760
        %1378 = vmatmul.mubr.f32.gmra.mrb[0].mxu0 %v1377
        %v1379 = vpop.f32.mrb[0].mxu0
        %v1380 = vadd.f32 %v1261, %v1379
        %v1381 = vpop.f32.mrb[0].mxu0
        %1382 = vdwg.mxu0
        %1383 = vmatprep.subr.mxu0 0.0
        %v1384 = vand.u32 %v806, 4294901760
        %1385 = vmatpush1.msra.mxu0 %v1384
        %1386 = vmatprep.subr.mxu0 0.0
        %v1387 = vand.u32 %v807, 4294901760
        %1388 = vmatpush1.msra.mxu0 %v1387
        %1389 = vmatprep.subr.mxu0 0.0
        %v1390 = vand.u32 %v808, 4294901760
        %1391 = vmatpush1.msra.mxu0 %v1390
        %1392 = vmatprep.subr.mxu0 0.0
        %v1393 = vand.u32 %v809, 4294901760
        %1394 = vmatpush1.msra.mxu0 %v1393
        %1395 = vmatprep.subr.mxu0 0.0
        %v1396 = vand.u32 %v810, 4294901760
        %1397 = vmatpush1.msra.mxu0 %v1396
        %1398 = vmatprep.subr.mxu0 0.0
        %v1399 = vand.u32 %v811, 4294901760
        %1400 = vmatpush1.msra.mxu0 %v1399
        %1401 = vmatprep.subr.mxu0 0.0
        %v1402 = vand.u32 %v812, 4294901760
        %1403 = vmatpush1.msra.mxu0 %v1402
        %1404 = vmatprep.subr.mxu0 0.0
        %v1405 = vand.u32 %v813, 4294901760
        %1406 = vmatpush1.msra.mxu0 %v1405
        %1407 = vmatprep.subr.mxu0 0.0
        %v1408 = vand.u32 %v814, 4294901760
        %1409 = vmatpush1.msra.mxu0 %v1408
        %1410 = vmatprep.subr.mxu0 0.0
        %v1411 = vand.u32 %v815, 4294901760
        %1412 = vmatpush1.msra.mxu0 %v1411
        %1413 = vmatprep.subr.mxu0 0.0
        %v1414 = vand.u32 %v816, 4294901760
        %1415 = vmatpush1.msra.mxu0 %v1414
        %1416 = vmatprep.subr.mxu0 0.0
        %v1417 = vand.u32 %v817, 4294901760
        %1418 = vmatpush1.msra.mxu0 %v1417
        %1419 = vmatprep.subr.mxu0 0.0
        %v1420 = vand.u32 %v818, 4294901760
        %1421 = vmatpush1.msra.mxu0 %v1420
        %1422 = vmatprep.subr.mxu0 0.0
        %v1423 = vand.u32 %v819, 4294901760
        %1424 = vmatpush1.msra.mxu0 %v1423
        %1425 = vmatprep.subr.mxu0 0.0
        %v1426 = vand.u32 %v820, 4294901760
        %1427 = vmatpush1.msra.mxu0 %v1426
        %1428 = vmatprep.subr.mxu0 0.0
        %v1429 = vand.u32 %v821, 4294901760
        %1430 = vmatpush1.msra.mxu0 %v1429
        %1431 = vmatprep.subr.mxu0 0.0
        %1432 = vmatpush1.msra.mxu0 0.0
        %1433 = vmatprep.subr.mxu0 0.0
        %1434 = vmatpush1.msra.mxu0 0.0
        %1435 = vmatprep.subr.mxu0 0.0
        %1436 = vmatpush1.msra.mxu0 0.0
        %1437 = vmatprep.subr.mxu0 0.0
        %1438 = vmatpush1.msra.mxu0 0.0
        %1439 = vmatprep.subr.mxu0 0.0
        %1440 = vmatpush1.msra.mxu0 0.0
        %1441 = vmatprep.subr.mxu0 0.0
        %1442 = vmatpush1.msra.mxu0 0.0
        %1443 = vmatprep.subr.mxu0 0.0
        %1444 = vmatpush1.msra.mxu0 0.0
        %1445 = vmatprep.subr.mxu0 0.0
        %1446 = vmatpush1.msra.mxu0 0.0
        %1447 = vmatprep.subr.mxu0 0.0
        %1448 = vmatpush1.msra.mxu0 0.0
        %1449 = vmatprep.subr.mxu0 0.0
        %1450 = vmatpush1.msra.mxu0 0.0
        %1451 = vmatprep.subr.mxu0 0.0
        %1452 = vmatpush1.msra.mxu0 0.0
        %1453 = vmatprep.subr.mxu0 0.0
        %1454 = vmatpush1.msra.mxu0 0.0
        %1455 = vmatprep.subr.mxu0 0.0
        %1456 = vmatpush1.msra.mxu0 0.0
        %1457 = vmatprep.subr.mxu0 0.0
        %1458 = vmatpush1.msra.mxu0 0.0
        %1459 = vmatprep.subr.mxu0 0.0
        %1460 = vmatpush1.msra.mxu0 0.0
        %1461 = vmatprep.subr.mxu0 0.0
        %1462 = vmatpush1.msra.mxu0 0.0
        %1463 = vmatprep.mubr.f32.mxu0 0.0
        %v1464 = vand.u32 %v805, 4294901760
        %1465 = vmatmul.mubr.f32.gmra.mrb[0].mxu0 %v1464
        %v1466 = vpop.f32.mrb[0].mxu0
        %v1467 = vadd.f32 %v1380, %v1466
        %v1468 = vpop.f32.mrb[0].mxu0
        %1469 = vdwg.mxu0
        %v1470 = vadd.f32 %v1467, %v274
        %1471 = vst.msk [vmem:[%s269] sm:$0xff] %vm275, %v1470
        %s1472 = sand.u32 %s181, 1
        %s1473 = scalar_lea.sflag [#allocation3], %s1472
        %s1474 = sand.u32 %s181, 1
        %s1475 = smul.addr %s1474, 8
        %s1476 = scalar_lea.vmem [#allocation2], %s1475
        // Predicated region
        $region49: #{tpu_custom_call.1} parent=47 // pred_check
          %p1477 = pneg %p191
        $region50: #{tpu_custom_call.1} parent=47 // pred_check_branch
          %1479 = sbr.rel (%p1477) target = $region52
        $region51: #{tpu_custom_call.1} parent=47 // pred_region
          %s1481 = ssub.s32 128, 128
          %1482 = vsyncadd %s1473, %s1481
          %s1483 = smul.addr %s21, 128
          %s1484 = scalar_lea.hbm %s7, %s1483
          %s1486 = sshll.u32 %s1476, 4
          %s1487 = int_to_ptr.vmem [resolvable:$true] %s1486
          %1489 = dma.vmem_to_hbm [thread:$0]  %s1487, 128, %s1484, %s1473
        $region52: #{tpu_custom_call.1} parent=47 // pred_fallthru
          _
      $region48: #{tpu_custom_call.1} parent=5 // pred_fallthru
        _
      %p1490 = scmp.le.s32.totalorder 2, %s16
      // Predicated region
      $region53: #{tpu_custom_call.1} parent=5 // pred_check
        %p1491 = pneg %p1490
      $region54: #{tpu_custom_call.1} parent=5 // pred_check_branch
        %1493 = sbr.rel (%p1491) target = $region56
      $region55: #{tpu_custom_call.1} parent=5 // pred_region
        %s1494 = ssub.s32 %s16, 2
        // Predicated region
        $region57: #{tpu_custom_call.1} parent=55 // pred_check
          %p1495 = pneg %p197
        $region58: #{tpu_custom_call.1} parent=55 // pred_check_branch
          %1497 = sbr.rel (%p1495) target = $region60
        $region59: #{tpu_custom_call.1} parent=55 // pred_region
          %s1498 = sand.u32 %s182, 1
          %s1499 = scalar_lea.sflag [#allocation3], %s1498
          %s1500 = sand.u32 %s182, 1
          %s1501 = smul.addr %s1500, 8
          %s1502 = scalar_lea.vmem [#allocation2], %s1501
          %1503 = dma.done %s1499, 128
        $region60: #{tpu_custom_call.1} parent=55 // pred_fallthru
          _
      $region56: #{tpu_custom_call.1} parent=5 // pred_fallthru
        _
    $region6: #{tpu_custom_call.1} parent=1 // loop_footer
      %s20 = sadd.s32 1, %s16
    $region7: #{tpu_custom_call.1} parent=1 // loop_footer_branch
      %15 = sbr.rel target = $region3
    $region8: #{tpu_custom_call.1} parent=1 // loop_exit
      _
    %1504 = vsyncpa [#allocation3], 1
    %s1505 = scalar_lea.sflag [#allocation3], 1
    %1506 = vsyncpa %s1505, 1

</llo_original>
